<compile_context>
chip_gen: v6e
topology: v6e:2x2x1
jax: 0.10.0
libtpu: 0.0.40
codegen_flags: <defaults>
</compile_context>

<pallas_src>
import jax
import jax.numpy as jnp
from jax.experimental import pallas as pl
from jax.experimental.pallas import tpu as pltpu


def lstm_wavefront_kernel(x_ref, w0_ref, wbig_ref, b_ref, mask_ref, out_ref, gx_ref):
    """Masked multi-layer LSTM, wavefront-fused, one batch tile per grid step.

    x_ref:    (T, Bt, H)      time-major embeddings for this batch tile
    w0_ref:   (H, 4H)         layer-0 input->gate weights, gate cols [i,f,o,g]
    wbig_ref: (L*4H, L*4H)    fused recurrent/inter-layer weights; only rows
                              [l*4H, l*4H+H) are nonzero (the "real" h lanes)
    b_ref:    (L, 1, 4H)      combined per-layer gate bias (b_ih + b_hh)
    mask_ref: (T, Bt, 4H)     float32 {0,1}; 1 while t < length_b
    out_ref:  (Bt, 4H)        wide final hidden state of the last layer
                              (real data in lanes [0,H))
    gx_ref:   (T, Bt, 4H)     VMEM scratch for the hoisted layer-0 projection
    """
    T, Bt, H = x_ref.shape
    L = b_ref.shape[0]
    G = 4 * H
    H3 = 3 * H

    # ---- hoisted: layer-0 input projection (+ bias) into VMEM scratch ------
    # Independent of the recurrent state -> off the serial chain; re-read per
    # step as a cheap vld instead of pinning T vregs of values.
    w0 = w0_ref[...]
    b0 = jnp.broadcast_to(b_ref[0], (Bt, G))
    for t in range(T):
        gx_ref[t] = jnp.dot(x_ref[t], w0, preferred_element_type=jnp.float32) + b0

    # ---- hoisted constants --------------------------------------------------
    w_big = wbig_ref[...]
    lane = jax.lax.broadcasted_iota(jnp.int32, (Bt, G), 1)
    tanh_sel = lane >= H3                         # gate cols [i, f, o | g]
    bias_hi = [None] + [jnp.broadcast_to(b_ref[l], (Bt, G)) for l in range(1, L)]

    # Per-layer "wide" state: real data in lanes [0, H); lanes [H, 4H) hold
    # bounded garbage that only ever multiplies exactly-zero rows of w_big.
    h = [jnp.zeros((Bt, G), jnp.float32) for _ in range(L)]
    c = [jnp.zeros((Bt, G), jnp.float32) for _ in range(L)]

    # ---- wavefront recurrence: layer l advances time t = s - l --------------
    for s in range(T + L - 1):                    # fully unrolled (T, L static)
        rec = None
        if s > 0:
            # 128-lane-aligned concat of the per-layer wide states -> one
            # block-structured matmul feeding every layer's gates.
            lhs = h[0] if L == 1 else jnp.concatenate(h, axis=1)
            rec = jnp.dot(lhs, w_big, preferred_element_type=jnp.float32)
        for l in range(L):
            t = s - l
            if t < 0 or t >= T:
                continue
            if l == 0:
                # gx already contains x@w_ih0 + b0.
                blk = gx_ref[t] if rec is None else rec[:, :G] + gx_ref[t]
            else:
                blk = rec[:, l * G:(l + 1) * G] + bias_hi[l]
            # Full-vreg transcendentals + static lane-mask select.
            act = jnp.where(tanh_sel, jnp.tanh(blk), jax.nn.sigmoid(blk))
            # Align f/o/g to lanes [0, H) on the XLU; i is already there.
            i_g = act
            f_g = pltpu.roll(act, shift=H3, axis=1)     # lanes [H,2H)  -> [0,H)
            o_g = pltpu.roll(act, shift=2 * H, axis=1)  # lanes [2H,3H) -> [0,H)
            g_g = pltpu.roll(act, shift=H, axis=1)      # lanes [3H,4H) -> [0,H)
            c_new = f_g * c[l] + i_g * g_g
            h_new = o_g * jnp.tanh(c_new)
            # Freeze state once past this row's length (arithmetic blend,
            # mask is exact {0,1} float32, no compare on the serial tail).
            m = mask_ref[t]
            c[l] = c[l] + m * (c_new - c[l])
            h[l] = h[l] + m * (h_new - h[l])

    out_ref[...] = h[L - 1].astype(out_ref.dtype)       # lane-dense (Bt, 4H)


def _reorder_ifgo_to_ifog(w):
    """Reorder gate blocks along axis 0 from PyTorch [i,f,g,o] to [i,f,o,g]."""
    H = w.shape[0] // 4
    return jnp.concatenate([w[:H], w[H:2 * H], w[3 * H:], w[2 * H:3 * H]], axis=0)


def lstm_mwe_forward(batch_mwe, mwe_lengths, w_ih, w_hh, b_ih, b_hh, b_tile=None):
    """batch_mwe: (B, T, H) batch-first; weights in PyTorch layout (L, 4H, H),
    gate rows [i, f, g, o]; biases (L, 4H).  Returns (B, H).

    Note: lengths must be >= 1 (pack_padded_sequence would raise on 0);
    a length-0 row here silently returns zeros."""
    B, T, H = batch_mwe.shape
    L = w_ih.shape[0]
    G = 4 * H

    # Pad batch to a sublane multiple and choose a batch tile (parallel grid
    # axis -> both TensorCores on v7x at production sizes; trivial here).
    B_pad = -(-B // 8) * 8
    if b_tile is None:
        b_tile = B_pad if B_pad <= 512 else 512
    b_tile = max(8, (b_tile // 8) * 8)
    B_pad = -(-B_pad // b_tile) * b_tile
    num_tiles = B_pad // b_tile

    # Time-major input, batch zero-padded.
    x_tm = jnp.transpose(batch_mwe, (1, 0, 2)).astype(jnp.float32)      # (T, B, H)
    x_pad = jnp.pad(x_tm, ((0, 0), (0, B_pad - B), (0, 0)))             # (T, B_pad, H)

    # Validity mask; padded rows get length 0 -> stay frozen at h=c=0.
    len_b = jnp.pad(mwe_lengths.astype(jnp.int32), (0, B_pad - B))
    mask_tb = (jnp.arange(T, dtype=jnp.int32)[:, None] < len_b[None, :])
    mask = jnp.broadcast_to(mask_tb[:, :, None], (T, B_pad, G)).astype(jnp.float32)

    # Gate-reordered, transposed weights: (in, 4H) with gate cols [i, f, o, g].
    w_ih_k = [_reorder_ifgo_to_ifog(w_ih[l]).T for l in range(L)]
    w_hh_k = [_reorder_ifgo_to_ifog(w_hh[l]).T for l in range(L)]
    b_k = jnp.stack(
        [_reorder_ifgo_to_ifog((b_ih[l] + b_hh[l])[:, None])[:, 0][None, :]
         for l in range(L)])                                            # (L, 1, 4H)
    w0 = w_ih_k[0]                                                      # (H, 4H)

    # Fused wavefront weight.  Only rows [l*G, l*G+H) (the "real" h lanes of
    # layer l) are nonzero; the per-layer gate blocks stay contiguous along N,
    # so on v5e the two 128-lane halves split cleanly into independent passes.
    w_big = jnp.zeros((L * G, L * G), jnp.float32)
    for l in range(L):
        w_big = w_big.at[l * G:l * G + H, l * G:(l + 1) * G].set(w_hh_k[l])
        if l >= 1:
            w_big = w_big.at[(l - 1) * G:(l - 1) * G + H, l * G:(l + 1) * G].set(w_ih_k[l])

    out_pad = pl.pallas_call(
        lstm_wavefront_kernel,
        out_shape=jax.ShapeDtypeStruct((B_pad, G), jnp.float32),
        grid_spec=pltpu.PrefetchScalarGridSpec(
            num_scalar_prefetch=0,
            grid=(num_tiles,),
            in_specs=[
                pl.BlockSpec((T, b_tile, H), lambda i: (0, i, 0)),        # x
                pl.BlockSpec((H, G), lambda i: (0, 0)),                   # w0 (replicated)
                pl.BlockSpec((L * G, L * G), lambda i: (0, 0)),           # w_big (replicated)
                pl.BlockSpec((L, 1, G), lambda i: (0, 0, 0)),             # biases (replicated)
                pl.BlockSpec((T, b_tile, G), lambda i: (0, i, 0)),        # mask
            ],
            out_specs=pl.BlockSpec((b_tile, G), lambda i: (i, 0)),
            scratch_shapes=[pltpu.VMEM((T, b_tile, G), jnp.float32)],     # gx scratch
        ),
        compiler_params=pltpu.CompilerParams(dimension_semantics=("parallel",)),
    )(x_pad, w0, w_big, b_k, mask)

    return out_pad[:B, :H]


def init_lstm_params(key, embedding_dim, num_layers):
    """PyTorch-layout params: xavier-normal weights, zero biases (matches __init__)."""
    H = embedding_dim
    w_ih_list, w_hh_list = [], []
    for _ in range(num_layers):
        key, k1, k2 = jax.random.split(key, 3)
        in_dim = H  # input_size == hidden_size for every layer (unidirectional)
        std_ih = (2.0 / (in_dim + 4 * H)) ** 0.5   # xavier_normal_ on (4H, in)
        std_hh = (2.0 / (H + 4 * H)) ** 0.5        # xavier_normal_ on (4H, H)
        w_ih_list.append(jax.random.normal(k1, (4 * H, in_dim), jnp.float32) * std_ih)
        w_hh_list.append(jax.random.normal(k2, (4 * H, H), jnp.float32) * std_hh)
    w_ih = jnp.stack(w_ih_list)                           # (L, 4H, H) rows [i,f,g,o]
    w_hh = jnp.stack(w_hh_list)                           # (L, 4H, H)
    b_ih = jnp.zeros((num_layers, 4 * H), jnp.float32)
    b_hh = jnp.zeros((num_layers, 4 * H), jnp.float32)
    return w_ih, w_hh, b_ih, b_hh


def lstm_mwe_reference(batch_mwe, mwe_lengths, w_ih, w_hh, b_ih, b_hh):
    """Pure-JAX reference using standard PyTorch gate order [i, f, g, o]."""
    B, T, H = batch_mwe.shape
    L = w_ih.shape[0]
    x = jnp.transpose(batch_mwe, (1, 0, 2)).astype(jnp.float32)   # (T, B, H)
    len_col = mwe_lengths.reshape(B, 1)
    h = jnp.zeros((B, H), jnp.float32)
    for layer in range(L):
        wi = w_ih[layer].T
        wh = w_hh[layer].T
        b = (b_ih[layer] + b_hh[layer])[None, :]
        h = jnp.zeros((B, H), jnp.float32)
        c = jnp.zeros((B, H), jnp.float32)
        outs = []
        for t in range(T):
            gates = x[t] @ wi + h @ wh + b
            i_g = jax.nn.sigmoid(gates[:, :H])
            f_g = jax.nn.sigmoid(gates[:, H:2 * H])
            g_g = jnp.tanh(gates[:, 2 * H:3 * H])
            o_g = jax.nn.sigmoid(gates[:, 3 * H:])
            c_new = f_g * c + i_g * g_g
            h_new = o_g * jnp.tanh(c_new)
            mask = len_col > t
            h = jnp.where(mask, h_new, h)
            c = jnp.where(mask, c_new, c)
            outs.append(h_new)
        x = jnp.stack(outs)
    return h


if __name__ == "__main__":
    # params = {'embedding_dim': 32, 'num_layers': 2}
    embedding_dim = 32
    num_layers = 2
    batch_size = 4
    max_entity_size = 8

    key = jax.random.PRNGKey(0)
    k_x, k_w = jax.random.split(key)

    batch_mwe = jax.random.normal(
        k_x, (batch_size, max_entity_size, embedding_dim), jnp.float32)
    # pack_padded_sequence(enforce_sorted=True) expects descending lengths >= 1.
    mwe_lengths = jnp.array([8, 5, 3, 1], dtype=jnp.int32)

    w_ih, w_hh, b_ih, b_hh = init_lstm_params(k_w, embedding_dim, num_layers)

    out = lstm_mwe_forward(batch_mwe, mwe_lengths, w_ih, w_hh, b_ih, b_hh)
    out = jax.block_until_ready(out)

    ref = lstm_mwe_reference(batch_mwe, mwe_lengths, w_ih, w_hh, b_ih, b_hh)
    assert out.shape == (batch_size, embedding_dim)
    assert jnp.allclose(out, ref, rtol=1e-4, atol=1e-4), "mismatch vs reference"

    print("KERNEL_OK")
</pallas_src>

<mosaic_0001>
module attributes {stable_mosaic.version = 11 : i64} {
  func.func @lstm_wavefront_kernel(%arg0: i32, %arg1: memref<8x8x32xf32, #tpu.memory_space<vmem>>, %arg2: memref<32x128xf32, #tpu.memory_space<vmem>>, %arg3: memref<256x256xf32, #tpu.memory_space<vmem>>, %arg4: memref<2x1x128xf32, #tpu.memory_space<vmem>>, %arg5: memref<8x8x128xf32, #tpu.memory_space<vmem>>, %arg6: memref<8x128xf32, #tpu.memory_space<vmem>>, %arg7: memref<8x8x128xf32, #tpu.memory_space<vmem>>) attributes {dimension_semantics = [#tpu.dimension_semantics<parallel>], iteration_bounds = array<i64: 1>, scalar_prefetch = 0 : i64, scratch_operands = 1 : i64, tpu.core_type = #tpu.core_type<tc>, window_params = [{transform_indices = @transform_0, window_bounds = array<i64: 8, 8, 32>}, {pipeline_mode = #tpu.pipeline_mode<synchronous>, transform_indices = @transform_1, window_bounds = array<i64: 32, 128>}, {pipeline_mode = #tpu.pipeline_mode<synchronous>, transform_indices = @transform_2, window_bounds = array<i64: 256, 256>}, {pipeline_mode = #tpu.pipeline_mode<synchronous>, transform_indices = @transform_3, window_bounds = array<i64: 2, 1, 128>}, {transform_indices = @transform_4, window_bounds = array<i64: 8, 8, 128>}, {transform_indices = @transform_5, window_bounds = array<i64: 8, 128>}]} {
    %c0 = arith.constant 0 : index
    %c0_0 = arith.constant 0 : index
    %0 = vector.load %arg2[%c0, %c0_0] : memref<32x128xf32, #tpu.memory_space<vmem>>, vector<32x128xf32>
    %c0_1 = arith.constant 0 : index
    %c0_2 = arith.constant 0 : index
    %c0_3 = arith.constant 0 : index
    %1 = vector.load %arg4[%c0_1, %c0_2, %c0_3] : memref<2x1x128xf32, #tpu.memory_space<vmem>>, vector<1x1x128xf32>
    %2 = vector.shape_cast %1 : vector<1x1x128xf32> to vector<1x128xf32>
    %3 = vector.shape_cast %2 : vector<1x128xf32> to vector<1x128xf32>
    %4 = vector.broadcast %3 : vector<1x128xf32> to vector<8x128xf32>
    %c0_4 = arith.constant 0 : index
    %c0_5 = arith.constant 0 : index
    %c0_6 = arith.constant 0 : index
    %5 = vector.load %arg1[%c0_4, %c0_5, %c0_6] : memref<8x8x32xf32, #tpu.memory_space<vmem>>, vector<1x8x32xf32>
    %6 = vector.shape_cast %5 : vector<1x8x32xf32> to vector<8x32xf32>
    %cst = arith.constant dense<0.000000e+00> : vector<8x128xf32>
    %7 = tpu.matmul %6, %0, %cst {dimension_numbers = #tpu.dot_dimension_numbers<[1], [0], [0], [1], [0, 0, 1, 1], [], []>} : vector<8x32xf32>, vector<32x128xf32>, vector<8x128xf32> -> vector<8x128xf32>
    %8 = arith.addf %7, %4 : vector<8x128xf32>
    %c0_7 = arith.constant 0 : index
    %c0_8 = arith.constant 0 : index
    %c0_9 = arith.constant 0 : index
    %9 = vector.load %arg7[%c0_7, %c0_8, %c0_9] : memref<8x8x128xf32, #tpu.memory_space<vmem>>, vector<1x8x128xf32>
    %10 = vector.shape_cast %9 : vector<1x8x128xf32> to vector<8x128xf32>
    %11 = vector.shape_cast %8 : vector<8x128xf32> to vector<1x8x128xf32>
    tpu.vector_store %arg7[%c0_7, %c0_8, %c0_9], %11 {strides = array<i32>} : memref<8x8x128xf32, #tpu.memory_space<vmem>>, vector<1x8x128xf32>,
    %c1 = arith.constant 1 : index
    %c0_10 = arith.constant 0 : index
    %c0_11 = arith.constant 0 : index
    %12 = vector.load %arg1[%c1, %c0_10, %c0_11] : memref<8x8x32xf32, #tpu.memory_space<vmem>>, vector<1x8x32xf32>
    %13 = vector.shape_cast %12 : vector<1x8x32xf32> to vector<8x32xf32>
    %cst_12 = arith.constant dense<0.000000e+00> : vector<8x128xf32>
    %14 = tpu.matmul %13, %0, %cst_12 {dimension_numbers = #tpu.dot_dimension_numbers<[1], [0], [0], [1], [0, 0, 1, 1], [], []>} : vector<8x32xf32>, vector<32x128xf32>, vector<8x128xf32> -> vector<8x128xf32>
    %15 = arith.addf %14, %4 : vector<8x128xf32>
    %c1_13 = arith.constant 1 : index
    %c0_14 = arith.constant 0 : index
    %c0_15 = arith.constant 0 : index
    %16 = vector.load %arg7[%c1_13, %c0_14, %c0_15] : memref<8x8x128xf32, #tpu.memory_space<vmem>>, vector<1x8x128xf32>
    %17 = vector.shape_cast %16 : vector<1x8x128xf32> to vector<8x128xf32>
    %18 = vector.shape_cast %15 : vector<8x128xf32> to vector<1x8x128xf32>
    tpu.vector_store %arg7[%c1_13, %c0_14, %c0_15], %18 {strides = array<i32>} : memref<8x8x128xf32, #tpu.memory_space<vmem>>, vector<1x8x128xf32>,
    %c2 = arith.constant 2 : index
    %c0_16 = arith.constant 0 : index
    %c0_17 = arith.constant 0 : index
    %19 = vector.load %arg1[%c2, %c0_16, %c0_17] : memref<8x8x32xf32, #tpu.memory_space<vmem>>, vector<1x8x32xf32>
    %20 = vector.shape_cast %19 : vector<1x8x32xf32> to vector<8x32xf32>
    %cst_18 = arith.constant dense<0.000000e+00> : vector<8x128xf32>
    %21 = tpu.matmul %20, %0, %cst_18 {dimension_numbers = #tpu.dot_dimension_numbers<[1], [0], [0], [1], [0, 0, 1, 1], [], []>} : vector<8x32xf32>, vector<32x128xf32>, vector<8x128xf32> -> vector<8x128xf32>
    %22 = arith.addf %21, %4 : vector<8x128xf32>
    %c2_19 = arith.constant 2 : index
    %c0_20 = arith.constant 0 : index
    %c0_21 = arith.constant 0 : index
    %23 = vector.load %arg7[%c2_19, %c0_20, %c0_21] : memref<8x8x128xf32, #tpu.memory_space<vmem>>, vector<1x8x128xf32>
    %24 = vector.shape_cast %23 : vector<1x8x128xf32> to vector<8x128xf32>
    %25 = vector.shape_cast %22 : vector<8x128xf32> to vector<1x8x128xf32>
    tpu.vector_store %arg7[%c2_19, %c0_20, %c0_21], %25 {strides = array<i32>} : memref<8x8x128xf32, #tpu.memory_space<vmem>>, vector<1x8x128xf32>,
    %c3 = arith.constant 3 : index
    %c0_22 = arith.constant 0 : index
    %c0_23 = arith.constant 0 : index
    %26 = vector.load %arg1[%c3, %c0_22, %c0_23] : memref<8x8x32xf32, #tpu.memory_space<vmem>>, vector<1x8x32xf32>
    %27 = vector.shape_cast %26 : vector<1x8x32xf32> to vector<8x32xf32>
    %cst_24 = arith.constant dense<0.000000e+00> : vector<8x128xf32>
    %28 = tpu.matmul %27, %0, %cst_24 {dimension_numbers = #tpu.dot_dimension_numbers<[1], [0], [0], [1], [0, 0, 1, 1], [], []>} : vector<8x32xf32>, vector<32x128xf32>, vector<8x128xf32> -> vector<8x128xf32>
    %29 = arith.addf %28, %4 : vector<8x128xf32>
    %c3_25 = arith.constant 3 : index
    %c0_26 = arith.constant 0 : index
    %c0_27 = arith.constant 0 : index
    %30 = vector.load %arg7[%c3_25, %c0_26, %c0_27] : memref<8x8x128xf32, #tpu.memory_space<vmem>>, vector<1x8x128xf32>
    %31 = vector.shape_cast %30 : vector<1x8x128xf32> to vector<8x128xf32>
    %32 = vector.shape_cast %29 : vector<8x128xf32> to vector<1x8x128xf32>
    tpu.vector_store %arg7[%c3_25, %c0_26, %c0_27], %32 {strides = array<i32>} : memref<8x8x128xf32, #tpu.memory_space<vmem>>, vector<1x8x128xf32>,
    %c4 = arith.constant 4 : index
    %c0_28 = arith.constant 0 : index
    %c0_29 = arith.constant 0 : index
    %33 = vector.load %arg1[%c4, %c0_28, %c0_29] : memref<8x8x32xf32, #tpu.memory_space<vmem>>, vector<1x8x32xf32>
    %34 = vector.shape_cast %33 : vector<1x8x32xf32> to vector<8x32xf32>
    %cst_30 = arith.constant dense<0.000000e+00> : vector<8x128xf32>
    %35 = tpu.matmul %34, %0, %cst_30 {dimension_numbers = #tpu.dot_dimension_numbers<[1], [0], [0], [1], [0, 0, 1, 1], [], []>} : vector<8x32xf32>, vector<32x128xf32>, vector<8x128xf32> -> vector<8x128xf32>
    %36 = arith.addf %35, %4 : vector<8x128xf32>
    %c4_31 = arith.constant 4 : index
    %c0_32 = arith.constant 0 : index
    %c0_33 = arith.constant 0 : index
    %37 = vector.load %arg7[%c4_31, %c0_32, %c0_33] : memref<8x8x128xf32, #tpu.memory_space<vmem>>, vector<1x8x128xf32>
    %38 = vector.shape_cast %37 : vector<1x8x128xf32> to vector<8x128xf32>
    %39 = vector.shape_cast %36 : vector<8x128xf32> to vector<1x8x128xf32>
    tpu.vector_store %arg7[%c4_31, %c0_32, %c0_33], %39 {strides = array<i32>} : memref<8x8x128xf32, #tpu.memory_space<vmem>>, vector<1x8x128xf32>,
    %c5 = arith.constant 5 : index
    %c0_34 = arith.constant 0 : index
    %c0_35 = arith.constant 0 : index
    %40 = vector.load %arg1[%c5, %c0_34, %c0_35] : memref<8x8x32xf32, #tpu.memory_space<vmem>>, vector<1x8x32xf32>
    %41 = vector.shape_cast %40 : vector<1x8x32xf32> to vector<8x32xf32>
    %cst_36 = arith.constant dense<0.000000e+00> : vector<8x128xf32>
    %42 = tpu.matmul %41, %0, %cst_36 {dimension_numbers = #tpu.dot_dimension_numbers<[1], [0], [0], [1], [0, 0, 1, 1], [], []>} : vector<8x32xf32>, vector<32x128xf32>, vector<8x128xf32> -> vector<8x128xf32>
    %43 = arith.addf %42, %4 : vector<8x128xf32>
    %c5_37 = arith.constant 5 : index
    %c0_38 = arith.constant 0 : index
    %c0_39 = arith.constant 0 : index
    %44 = vector.load %arg7[%c5_37, %c0_38, %c0_39] : memref<8x8x128xf32, #tpu.memory_space<vmem>>, vector<1x8x128xf32>
    %45 = vector.shape_cast %44 : vector<1x8x128xf32> to vector<8x128xf32>
    %46 = vector.shape_cast %43 : vector<8x128xf32> to vector<1x8x128xf32>
    tpu.vector_store %arg7[%c5_37, %c0_38, %c0_39], %46 {strides = array<i32>} : memref<8x8x128xf32, #tpu.memory_space<vmem>>, vector<1x8x128xf32>,
    %c6 = arith.constant 6 : index
    %c0_40 = arith.constant 0 : index
    %c0_41 = arith.constant 0 : index
    %47 = vector.load %arg1[%c6, %c0_40, %c0_41] : memref<8x8x32xf32, #tpu.memory_space<vmem>>, vector<1x8x32xf32>
    %48 = vector.shape_cast %47 : vector<1x8x32xf32> to vector<8x32xf32>
    %cst_42 = arith.constant dense<0.000000e+00> : vector<8x128xf32>
    %49 = tpu.matmul %48, %0, %cst_42 {dimension_numbers = #tpu.dot_dimension_numbers<[1], [0], [0], [1], [0, 0, 1, 1], [], []>} : vector<8x32xf32>, vector<32x128xf32>, vector<8x128xf32> -> vector<8x128xf32>
    %50 = arith.addf %49, %4 : vector<8x128xf32>
    %c6_43 = arith.constant 6 : index
    %c0_44 = arith.constant 0 : index
    %c0_45 = arith.constant 0 : index
    %51 = vector.load %arg7[%c6_43, %c0_44, %c0_45] : memref<8x8x128xf32, #tpu.memory_space<vmem>>, vector<1x8x128xf32>
    %52 = vector.shape_cast %51 : vector<1x8x128xf32> to vector<8x128xf32>
    %53 = vector.shape_cast %50 : vector<8x128xf32> to vector<1x8x128xf32>
    tpu.vector_store %arg7[%c6_43, %c0_44, %c0_45], %53 {strides = array<i32>} : memref<8x8x128xf32, #tpu.memory_space<vmem>>, vector<1x8x128xf32>,
    %c7 = arith.constant 7 : index
    %c0_46 = arith.constant 0 : index
    %c0_47 = arith.constant 0 : index
    %54 = vector.load %arg1[%c7, %c0_46, %c0_47] : memref<8x8x32xf32, #tpu.memory_space<vmem>>, vector<1x8x32xf32>
    %55 = vector.shape_cast %54 : vector<1x8x32xf32> to vector<8x32xf32>
    %cst_48 = arith.constant dense<0.000000e+00> : vector<8x128xf32>
    %56 = tpu.matmul %55, %0, %cst_48 {dimension_numbers = #tpu.dot_dimension_numbers<[1], [0], [0], [1], [0, 0, 1, 1], [], []>} : vector<8x32xf32>, vector<32x128xf32>, vector<8x128xf32> -> vector<8x128xf32>
    %57 = arith.addf %56, %4 : vector<8x128xf32>
    %c7_49 = arith.constant 7 : index
    %c0_50 = arith.constant 0 : index
    %c0_51 = arith.constant 0 : index
    %58 = vector.load %arg7[%c7_49, %c0_50, %c0_51] : memref<8x8x128xf32, #tpu.memory_space<vmem>>, vector<1x8x128xf32>
    %59 = vector.shape_cast %58 : vector<1x8x128xf32> to vector<8x128xf32>
    %60 = vector.shape_cast %57 : vector<8x128xf32> to vector<1x8x128xf32>
    tpu.vector_store %arg7[%c7_49, %c0_50, %c0_51], %60 {strides = array<i32>} : memref<8x8x128xf32, #tpu.memory_space<vmem>>, vector<1x8x128xf32>,
    %c0_52 = arith.constant 0 : index
    %c0_53 = arith.constant 0 : index
    %61 = vector.load %arg3[%c0_52, %c0_53] : memref<256x256xf32, #tpu.memory_space<vmem>>, vector<256x256xf32>
    %62 = tpu.iota {dimensions = array<i32: 1>} : vector<8x128xi32>
    %c96_i32 = arith.constant 96 : i32
    %63 = vector.broadcast %c96_i32 : i32 to vector<8x128xi32>
    %64 = arith.cmpi sge, %62, %63 : vector<8x128xi32>
    %c1_54 = arith.constant 1 : index
    %c0_55 = arith.constant 0 : index
    %c0_56 = arith.constant 0 : index
    %65 = vector.load %arg4[%c1_54, %c0_55, %c0_56] : memref<2x1x128xf32, #tpu.memory_space<vmem>>, vector<1x1x128xf32>
    %66 = vector.shape_cast %65 : vector<1x1x128xf32> to vector<1x128xf32>
    %67 = vector.shape_cast %66 : vector<1x128xf32> to vector<1x128xf32>
    %68 = vector.broadcast %67 : vector<1x128xf32> to vector<8x128xf32>
    %cst_57 = arith.constant 0.000000e+00 : f32
    %69 = vector.broadcast %cst_57 : f32 to vector<8x128xf32>
    %cst_58 = arith.constant 0.000000e+00 : f32
    %70 = vector.broadcast %cst_58 : f32 to vector<8x128xf32>
    %cst_59 = arith.constant 0.000000e+00 : f32
    %71 = vector.broadcast %cst_59 : f32 to vector<8x128xf32>
    %cst_60 = arith.constant 0.000000e+00 : f32
    %72 = vector.broadcast %cst_60 : f32 to vector<8x128xf32>
    %c0_61 = arith.constant 0 : index
    %c0_62 = arith.constant 0 : index
    %c0_63 = arith.constant 0 : index
    %73 = vector.load %arg7[%c0_61, %c0_62, %c0_63] : memref<8x8x128xf32, #tpu.memory_space<vmem>>, vector<1x8x128xf32>
    %74 = vector.shape_cast %73 : vector<1x8x128xf32> to vector<8x128xf32>
    %75 = math.tanh %74 : vector<8x128xf32>
    %76 = arith.negf %74 : vector<8x128xf32>
    %77 = math.exp %76 : vector<8x128xf32>
    %cst_64 = arith.constant 1.000000e+00 : f32
    %78 = vector.broadcast %cst_64 : f32 to vector<8x128xf32>
    %79 = arith.addf %78, %77 : vector<8x128xf32>
    %80 = arith.divf %78, %79 : vector<8x128xf32>
    %81 = arith.select %64, %75, %80 : vector<8x128xi1>, vector<8x128xf32>
    %c96_i32_65 = arith.constant 96 : i32
    %82 = tpu.dynamic_rotate %81 by %c96_i32_65 dim 1 : vector<8x128xf32>, i32 -> vector<8x128xf32>
    %c64_i32 = arith.constant 64 : i32
    %83 = tpu.dynamic_rotate %81 by %c64_i32 dim 1 : vector<8x128xf32>, i32 -> vector<8x128xf32>
    %c32_i32 = arith.constant 32 : i32
    %84 = tpu.dynamic_rotate %81 by %c32_i32 dim 1 : vector<8x128xf32>, i32 -> vector<8x128xf32>
    %85 = arith.mulf %82, %71 : vector<8x128xf32>
    %86 = arith.mulf %81, %84 : vector<8x128xf32>
    %87 = arith.addf %85, %86 : vector<8x128xf32>
    %88 = math.tanh %87 : vector<8x128xf32>
    %89 = arith.mulf %83, %88 : vector<8x128xf32>
    %c0_66 = arith.constant 0 : index
    %c0_67 = arith.constant 0 : index
    %c0_68 = arith.constant 0 : index
    %90 = vector.load %arg5[%c0_66, %c0_67, %c0_68] : memref<8x8x128xf32, #tpu.memory_space<vmem>>, vector<1x8x128xf32>
    %91 = vector.shape_cast %90 : vector<1x8x128xf32> to vector<8x128xf32>
    %92 = arith.subf %87, %71 : vector<8x128xf32>
    %93 = arith.mulf %91, %92 : vector<8x128xf32>
    %94 = arith.addf %71, %93 : vector<8x128xf32>
    %95 = arith.subf %89, %69 : vector<8x128xf32>
    %96 = arith.mulf %91, %95 : vector<8x128xf32>
    %97 = arith.addf %69, %96 : vector<8x128xf32>
    %98 = tpu.concatenate %97, %70 in 1 : vector<8x128xf32>, vector<8x128xf32> -> vector<8x256xf32>
    %cst_69 = arith.constant dense<0.000000e+00> : vector<8x256xf32>
    %99 = tpu.matmul %98, %61, %cst_69 {dimension_numbers = #tpu.dot_dimension_numbers<[1], [0], [0], [1], [0, 0, 1, 1], [], []>} : vector<8x256xf32>, vector<256x256xf32>, vector<8x256xf32> -> vector<8x256xf32>
    %100 = vector.extract_strided_slice %99 {offsets = [0, 0], sizes = [8, 128], strides = [1, 1]} : vector<8x256xf32> to vector<8x128xf32>
    %c1_70 = arith.constant 1 : index
    %c0_71 = arith.constant 0 : index
    %c0_72 = arith.constant 0 : index
    %101 = vector.load %arg7[%c1_70, %c0_71, %c0_72] : memref<8x8x128xf32, #tpu.memory_space<vmem>>, vector<1x8x128xf32>
    %102 = vector.shape_cast %101 : vector<1x8x128xf32> to vector<8x128xf32>
    %103 = arith.addf %100, %102 : vector<8x128xf32>
    %104 = math.tanh %103 : vector<8x128xf32>
    %105 = arith.negf %103 : vector<8x128xf32>
    %106 = math.exp %105 : vector<8x128xf32>
    %cst_73 = arith.constant 1.000000e+00 : f32
    %107 = vector.broadcast %cst_73 : f32 to vector<8x128xf32>
    %108 = arith.addf %107, %106 : vector<8x128xf32>
    %109 = arith.divf %107, %108 : vector<8x128xf32>
    %110 = arith.select %64, %104, %109 : vector<8x128xi1>, vector<8x128xf32>
    %c96_i32_74 = arith.constant 96 : i32
    %111 = tpu.dynamic_rotate %110 by %c96_i32_74 dim 1 : vector<8x128xf32>, i32 -> vector<8x128xf32>
    %c64_i32_75 = arith.constant 64 : i32
    %112 = tpu.dynamic_rotate %110 by %c64_i32_75 dim 1 : vector<8x128xf32>, i32 -> vector<8x128xf32>
    %c32_i32_76 = arith.constant 32 : i32
    %113 = tpu.dynamic_rotate %110 by %c32_i32_76 dim 1 : vector<8x128xf32>, i32 -> vector<8x128xf32>
    %114 = arith.mulf %111, %94 : vector<8x128xf32>
    %115 = arith.mulf %110, %113 : vector<8x128xf32>
    %116 = arith.addf %114, %115 : vector<8x128xf32>
    %117 = math.tanh %116 : vector<8x128xf32>
    %118 = arith.mulf %112, %117 : vector<8x128xf32>
    %c1_77 = arith.constant 1 : index
    %c0_78 = arith.constant 0 : index
    %c0_79 = arith.constant 0 : index
    %119 = vector.load %arg5[%c1_77, %c0_78, %c0_79] : memref<8x8x128xf32, #tpu.memory_space<vmem>>, vector<1x8x128xf32>
    %120 = vector.shape_cast %119 : vector<1x8x128xf32> to vector<8x128xf32>
    %121 = arith.subf %116, %94 : vector<8x128xf32>
    %122 = arith.mulf %120, %121 : vector<8x128xf32>
    %123 = arith.addf %94, %122 : vector<8x128xf32>
    %124 = arith.subf %118, %97 : vector<8x128xf32>
    %125 = arith.mulf %120, %124 : vector<8x128xf32>
    %126 = arith.addf %97, %125 : vector<8x128xf32>
    %127 = vector.extract_strided_slice %99 {offsets = [0, 128], sizes = [8, 128], strides = [1, 1]} : vector<8x256xf32> to vector<8x128xf32>
    %128 = arith.addf %127, %68 : vector<8x128xf32>
    %129 = math.tanh %128 : vector<8x128xf32>
    %130 = arith.negf %128 : vector<8x128xf32>
    %131 = math.exp %130 : vector<8x128xf32>
    %cst_80 = arith.constant 1.000000e+00 : f32
    %132 = vector.broadcast %cst_80 : f32 to vector<8x128xf32>
    %133 = arith.addf %132, %131 : vector<8x128xf32>
    %134 = arith.divf %132, %133 : vector<8x128xf32>
    %135 = arith.select %64, %129, %134 : vector<8x128xi1>, vector<8x128xf32>
    %c96_i32_81 = arith.constant 96 : i32
    %136 = tpu.dynamic_rotate %135 by %c96_i32_81 dim 1 : vector<8x128xf32>, i32 -> vector<8x128xf32>
    %c64_i32_82 = arith.constant 64 : i32
    %137 = tpu.dynamic_rotate %135 by %c64_i32_82 dim 1 : vector<8x128xf32>, i32 -> vector<8x128xf32>
    %c32_i32_83 = arith.constant 32 : i32
    %138 = tpu.dynamic_rotate %135 by %c32_i32_83 dim 1 : vector<8x128xf32>, i32 -> vector<8x128xf32>
    %139 = arith.mulf %136, %72 : vector<8x128xf32>
    %140 = arith.mulf %135, %138 : vector<8x128xf32>
    %141 = arith.addf %139, %140 : vector<8x128xf32>
    %142 = math.tanh %141 : vector<8x128xf32>
    %143 = arith.mulf %137, %142 : vector<8x128xf32>
    %c0_84 = arith.constant 0 : index
    %c0_85 = arith.constant 0 : index
    %c0_86 = arith.constant 0 : index
    %144 = vector.load %arg5[%c0_84, %c0_85, %c0_86] : memref<8x8x128xf32, #tpu.memory_space<vmem>>, vector<1x8x128xf32>
    %145 = vector.shape_cast %144 : vector<1x8x128xf32> to vector<8x128xf32>
    %146 = arith.subf %141, %72 : vector<8x128xf32>
    %147 = arith.mulf %145, %146 : vector<8x128xf32>
    %148 = arith.addf %72, %147 : vector<8x128xf32>
    %149 = arith.subf %143, %70 : vector<8x128xf32>
    %150 = arith.mulf %145, %149 : vector<8x128xf32>
    %151 = arith.addf %70, %150 : vector<8x128xf32>
    %152 = tpu.concatenate %126, %151 in 1 : vector<8x128xf32>, vector<8x128xf32> -> vector<8x256xf32>
    %cst_87 = arith.constant dense<0.000000e+00> : vector<8x256xf32>
    %153 = tpu.matmul %152, %61, %cst_87 {dimension_numbers = #tpu.dot_dimension_numbers<[1], [0], [0], [1], [0, 0, 1, 1], [], []>} : vector<8x256xf32>, vector<256x256xf32>, vector<8x256xf32> -> vector<8x256xf32>
    %154 = vector.extract_strided_slice %153 {offsets = [0, 0], sizes = [8, 128], strides = [1, 1]} : vector<8x256xf32> to vector<8x128xf32>
    %c2_88 = arith.constant 2 : index
    %c0_89 = arith.constant 0 : index
    %c0_90 = arith.constant 0 : index
    %155 = vector.load %arg7[%c2_88, %c0_89, %c0_90] : memref<8x8x128xf32, #tpu.memory_space<vmem>>, vector<1x8x128xf32>
    %156 = vector.shape_cast %155 : vector<1x8x128xf32> to vector<8x128xf32>
    %157 = arith.addf %154, %156 : vector<8x128xf32>
    %158 = math.tanh %157 : vector<8x128xf32>
    %159 = arith.negf %157 : vector<8x128xf32>
    %160 = math.exp %159 : vector<8x128xf32>
    %cst_91 = arith.constant 1.000000e+00 : f32
    %161 = vector.broadcast %cst_91 : f32 to vector<8x128xf32>
    %162 = arith.addf %161, %160 : vector<8x128xf32>
    %163 = arith.divf %161, %162 : vector<8x128xf32>
    %164 = arith.select %64, %158, %163 : vector<8x128xi1>, vector<8x128xf32>
    %c96_i32_92 = arith.constant 96 : i32
    %165 = tpu.dynamic_rotate %164 by %c96_i32_92 dim 1 : vector<8x128xf32>, i32 -> vector<8x128xf32>
    %c64_i32_93 = arith.constant 64 : i32
    %166 = tpu.dynamic_rotate %164 by %c64_i32_93 dim 1 : vector<8x128xf32>, i32 -> vector<8x128xf32>
    %c32_i32_94 = arith.constant 32 : i32
    %167 = tpu.dynamic_rotate %164 by %c32_i32_94 dim 1 : vector<8x128xf32>, i32 -> vector<8x128xf32>
    %168 = arith.mulf %165, %123 : vector<8x128xf32>
    %169 = arith.mulf %164, %167 : vector<8x128xf32>
    %170 = arith.addf %168, %169 : vector<8x128xf32>
    %171 = math.tanh %170 : vector<8x128xf32>
    %172 = arith.mulf %166, %171 : vector<8x128xf32>
    %c2_95 = arith.constant 2 : index
    %c0_96 = arith.constant 0 : index
    %c0_97 = arith.constant 0 : index
    %173 = vector.load %arg5[%c2_95, %c0_96, %c0_97] : memref<8x8x128xf32, #tpu.memory_space<vmem>>, vector<1x8x128xf32>
    %174 = vector.shape_cast %173 : vector<1x8x128xf32> to vector<8x128xf32>
    %175 = arith.subf %170, %123 : vector<8x128xf32>
    %176 = arith.mulf %174, %175 : vector<8x128xf32>
    %177 = arith.addf %123, %176 : vector<8x128xf32>
    %178 = arith.subf %172, %126 : vector<8x128xf32>
    %179 = arith.mulf %174, %178 : vector<8x128xf32>
    %180 = arith.addf %126, %179 : vector<8x128xf32>
    %181 = vector.extract_strided_slice %153 {offsets = [0, 128], sizes = [8, 128], strides = [1, 1]} : vector<8x256xf32> to vector<8x128xf32>
    %182 = arith.addf %181, %68 : vector<8x128xf32>
    %183 = math.tanh %182 : vector<8x128xf32>
    %184 = arith.negf %182 : vector<8x128xf32>
    %185 = math.exp %184 : vector<8x128xf32>
    %cst_98 = arith.constant 1.000000e+00 : f32
    %186 = vector.broadcast %cst_98 : f32 to vector<8x128xf32>
    %187 = arith.addf %186, %185 : vector<8x128xf32>
    %188 = arith.divf %186, %187 : vector<8x128xf32>
    %189 = arith.select %64, %183, %188 : vector<8x128xi1>, vector<8x128xf32>
    %c96_i32_99 = arith.constant 96 : i32
    %190 = tpu.dynamic_rotate %189 by %c96_i32_99 dim 1 : vector<8x128xf32>, i32 -> vector<8x128xf32>
    %c64_i32_100 = arith.constant 64 : i32
    %191 = tpu.dynamic_rotate %189 by %c64_i32_100 dim 1 : vector<8x128xf32>, i32 -> vector<8x128xf32>
    %c32_i32_101 = arith.constant 32 : i32
    %192 = tpu.dynamic_rotate %189 by %c32_i32_101 dim 1 : vector<8x128xf32>, i32 -> vector<8x128xf32>
    %193 = arith.mulf %190, %148 : vector<8x128xf32>
    %194 = arith.mulf %189, %192 : vector<8x128xf32>
    %195 = arith.addf %193, %194 : vector<8x128xf32>
    %196 = math.tanh %195 : vector<8x128xf32>
    %197 = arith.mulf %191, %196 : vector<8x128xf32>
    %c1_102 = arith.constant 1 : index
    %c0_103 = arith.constant 0 : index
    %c0_104 = arith.constant 0 : index
    %198 = vector.load %arg5[%c1_102, %c0_103, %c0_104] : memref<8x8x128xf32, #tpu.memory_space<vmem>>, vector<1x8x128xf32>
    %199 = vector.shape_cast %198 : vector<1x8x128xf32> to vector<8x128xf32>
    %200 = arith.subf %195, %148 : vector<8x128xf32>
    %201 = arith.mulf %199, %200 : vector<8x128xf32>
    %202 = arith.addf %148, %201 : vector<8x128xf32>
    %203 = arith.subf %197, %151 : vector<8x128xf32>
    %204 = arith.mulf %199, %203 : vector<8x128xf32>
    %205 = arith.addf %151, %204 : vector<8x128xf32>
    %206 = tpu.concatenate %180, %205 in 1 : vector<8x128xf32>, vector<8x128xf32> -> vector<8x256xf32>
    %cst_105 = arith.constant dense<0.000000e+00> : vector<8x256xf32>
    %207 = tpu.matmul %206, %61, %cst_105 {dimension_numbers = #tpu.dot_dimension_numbers<[1], [0], [0], [1], [0, 0, 1, 1], [], []>} : vector<8x256xf32>, vector<256x256xf32>, vector<8x256xf32> -> vector<8x256xf32>
    %208 = vector.extract_strided_slice %207 {offsets = [0, 0], sizes = [8, 128], strides = [1, 1]} : vector<8x256xf32> to vector<8x128xf32>
    %c3_106 = arith.constant 3 : index
    %c0_107 = arith.constant 0 : index
    %c0_108 = arith.constant 0 : index
    %209 = vector.load %arg7[%c3_106, %c0_107, %c0_108] : memref<8x8x128xf32, #tpu.memory_space<vmem>>, vector<1x8x128xf32>
    %210 = vector.shape_cast %209 : vector<1x8x128xf32> to vector<8x128xf32>
    %211 = arith.addf %208, %210 : vector<8x128xf32>
    %212 = math.tanh %211 : vector<8x128xf32>
    %213 = arith.negf %211 : vector<8x128xf32>
    %214 = math.exp %213 : vector<8x128xf32>
    %cst_109 = arith.constant 1.000000e+00 : f32
    %215 = vector.broadcast %cst_109 : f32 to vector<8x128xf32>
    %216 = arith.addf %215, %214 : vector<8x128xf32>
    %217 = arith.divf %215, %216 : vector<8x128xf32>
    %218 = arith.select %64, %212, %217 : vector<8x128xi1>, vector<8x128xf32>
    %c96_i32_110 = arith.constant 96 : i32
    %219 = tpu.dynamic_rotate %218 by %c96_i32_110 dim 1 : vector<8x128xf32>, i32 -> vector<8x128xf32>
    %c64_i32_111 = arith.constant 64 : i32
    %220 = tpu.dynamic_rotate %218 by %c64_i32_111 dim 1 : vector<8x128xf32>, i32 -> vector<8x128xf32>
    %c32_i32_112 = arith.constant 32 : i32
    %221 = tpu.dynamic_rotate %218 by %c32_i32_112 dim 1 : vector<8x128xf32>, i32 -> vector<8x128xf32>
    %222 = arith.mulf %219, %177 : vector<8x128xf32>
    %223 = arith.mulf %218, %221 : vector<8x128xf32>
    %224 = arith.addf %222, %223 : vector<8x128xf32>
    %225 = math.tanh %224 : vector<8x128xf32>
    %226 = arith.mulf %220, %225 : vector<8x128xf32>
    %c3_113 = arith.constant 3 : index
    %c0_114 = arith.constant 0 : index
    %c0_115 = arith.constant 0 : index
    %227 = vector.load %arg5[%c3_113, %c0_114, %c0_115] : memref<8x8x128xf32, #tpu.memory_space<vmem>>, vector<1x8x128xf32>
    %228 = vector.shape_cast %227 : vector<1x8x128xf32> to vector<8x128xf32>
    %229 = arith.subf %224, %177 : vector<8x128xf32>
    %230 = arith.mulf %228, %229 : vector<8x128xf32>
    %231 = arith.addf %177, %230 : vector<8x128xf32>
    %232 = arith.subf %226, %180 : vector<8x128xf32>
    %233 = arith.mulf %228, %232 : vector<8x128xf32>
    %234 = arith.addf %180, %233 : vector<8x128xf32>
    %235 = vector.extract_strided_slice %207 {offsets = [0, 128], sizes = [8, 128], strides = [1, 1]} : vector<8x256xf32> to vector<8x128xf32>
    %236 = arith.addf %235, %68 : vector<8x128xf32>
    %237 = math.tanh %236 : vector<8x128xf32>
    %238 = arith.negf %236 : vector<8x128xf32>
    %239 = math.exp %238 : vector<8x128xf32>
    %cst_116 = arith.constant 1.000000e+00 : f32
    %240 = vector.broadcast %cst_116 : f32 to vector<8x128xf32>
    %241 = arith.addf %240, %239 : vector<8x128xf32>
    %242 = arith.divf %240, %241 : vector<8x128xf32>
    %243 = arith.select %64, %237, %242 : vector<8x128xi1>, vector<8x128xf32>
    %c96_i32_117 = arith.constant 96 : i32
    %244 = tpu.dynamic_rotate %243 by %c96_i32_117 dim 1 : vector<8x128xf32>, i32 -> vector<8x128xf32>
    %c64_i32_118 = arith.constant 64 : i32
    %245 = tpu.dynamic_rotate %243 by %c64_i32_118 dim 1 : vector<8x128xf32>, i32 -> vector<8x128xf32>
    %c32_i32_119 = arith.constant 32 : i32
    %246 = tpu.dynamic_rotate %243 by %c32_i32_119 dim 1 : vector<8x128xf32>, i32 -> vector<8x128xf32>
    %247 = arith.mulf %244, %202 : vector<8x128xf32>
    %248 = arith.mulf %243, %246 : vector<8x128xf32>
    %249 = arith.addf %247, %248 : vector<8x128xf32>
    %250 = math.tanh %249 : vector<8x128xf32>
    %251 = arith.mulf %245, %250 : vector<8x128xf32>
    %c2_120 = arith.constant 2 : index
    %c0_121 = arith.constant 0 : index
    %c0_122 = arith.constant 0 : index
    %252 = vector.load %arg5[%c2_120, %c0_121, %c0_122] : memref<8x8x128xf32, #tpu.memory_space<vmem>>, vector<1x8x128xf32>
    %253 = vector.shape_cast %252 : vector<1x8x128xf32> to vector<8x128xf32>
    %254 = arith.subf %249, %202 : vector<8x128xf32>
    %255 = arith.mulf %253, %254 : vector<8x128xf32>
    %256 = arith.addf %202, %255 : vector<8x128xf32>
    %257 = arith.subf %251, %205 : vector<8x128xf32>
    %258 = arith.mulf %253, %257 : vector<8x128xf32>
    %259 = arith.addf %205, %258 : vector<8x128xf32>
    %260 = tpu.concatenate %234, %259 in 1 : vector<8x128xf32>, vector<8x128xf32> -> vector<8x256xf32>
    %cst_123 = arith.constant dense<0.000000e+00> : vector<8x256xf32>
    %261 = tpu.matmul %260, %61, %cst_123 {dimension_numbers = #tpu.dot_dimension_numbers<[1], [0], [0], [1], [0, 0, 1, 1], [], []>} : vector<8x256xf32>, vector<256x256xf32>, vector<8x256xf32> -> vector<8x256xf32>
    %262 = vector.extract_strided_slice %261 {offsets = [0, 0], sizes = [8, 128], strides = [1, 1]} : vector<8x256xf32> to vector<8x128xf32>
    %c4_124 = arith.constant 4 : index
    %c0_125 = arith.constant 0 : index
    %c0_126 = arith.constant 0 : index
    %263 = vector.load %arg7[%c4_124, %c0_125, %c0_126] : memref<8x8x128xf32, #tpu.memory_space<vmem>>, vector<1x8x128xf32>
    %264 = vector.shape_cast %263 : vector<1x8x128xf32> to vector<8x128xf32>
    %265 = arith.addf %262, %264 : vector<8x128xf32>
    %266 = math.tanh %265 : vector<8x128xf32>
    %267 = arith.negf %265 : vector<8x128xf32>
    %268 = math.exp %267 : vector<8x128xf32>
    %cst_127 = arith.constant 1.000000e+00 : f32
    %269 = vector.broadcast %cst_127 : f32 to vector<8x128xf32>
    %270 = arith.addf %269, %268 : vector<8x128xf32>
    %271 = arith.divf %269, %270 : vector<8x128xf32>
    %272 = arith.select %64, %266, %271 : vector<8x128xi1>, vector<8x128xf32>
    %c96_i32_128 = arith.constant 96 : i32
    %273 = tpu.dynamic_rotate %272 by %c96_i32_128 dim 1 : vector<8x128xf32>, i32 -> vector<8x128xf32>
    %c64_i32_129 = arith.constant 64 : i32
    %274 = tpu.dynamic_rotate %272 by %c64_i32_129 dim 1 : vector<8x128xf32>, i32 -> vector<8x128xf32>
    %c32_i32_130 = arith.constant 32 : i32
    %275 = tpu.dynamic_rotate %272 by %c32_i32_130 dim 1 : vector<8x128xf32>, i32 -> vector<8x128xf32>
    %276 = arith.mulf %273, %231 : vector<8x128xf32>
    %277 = arith.mulf %272, %275 : vector<8x128xf32>
    %278 = arith.addf %276, %277 : vector<8x128xf32>
    %279 = math.tanh %278 : vector<8x128xf32>
    %280 = arith.mulf %274, %279 : vector<8x128xf32>
    %c4_131 = arith.constant 4 : index
    %c0_132 = arith.constant 0 : index
    %c0_133 = arith.constant 0 : index
    %281 = vector.load %arg5[%c4_131, %c0_132, %c0_133] : memref<8x8x128xf32, #tpu.memory_space<vmem>>, vector<1x8x128xf32>
    %282 = vector.shape_cast %281 : vector<1x8x128xf32> to vector<8x128xf32>
    %283 = arith.subf %278, %231 : vector<8x128xf32>
    %284 = arith.mulf %282, %283 : vector<8x128xf32>
    %285 = arith.addf %231, %284 : vector<8x128xf32>
    %286 = arith.subf %280, %234 : vector<8x128xf32>
    %287 = arith.mulf %282, %286 : vector<8x128xf32>
    %288 = arith.addf %234, %287 : vector<8x128xf32>
    %289 = vector.extract_strided_slice %261 {offsets = [0, 128], sizes = [8, 128], strides = [1, 1]} : vector<8x256xf32> to vector<8x128xf32>
    %290 = arith.addf %289, %68 : vector<8x128xf32>
    %291 = math.tanh %290 : vector<8x128xf32>
    %292 = arith.negf %290 : vector<8x128xf32>
    %293 = math.exp %292 : vector<8x128xf32>
    %cst_134 = arith.constant 1.000000e+00 : f32
    %294 = vector.broadcast %cst_134 : f32 to vector<8x128xf32>
    %295 = arith.addf %294, %293 : vector<8x128xf32>
    %296 = arith.divf %294, %295 : vector<8x128xf32>
    %297 = arith.select %64, %291, %296 : vector<8x128xi1>, vector<8x128xf32>
    %c96_i32_135 = arith.constant 96 : i32
    %298 = tpu.dynamic_rotate %297 by %c96_i32_135 dim 1 : vector<8x128xf32>, i32 -> vector<8x128xf32>
    %c64_i32_136 = arith.constant 64 : i32
    %299 = tpu.dynamic_rotate %297 by %c64_i32_136 dim 1 : vector<8x128xf32>, i32 -> vector<8x128xf32>
    %c32_i32_137 = arith.constant 32 : i32
    %300 = tpu.dynamic_rotate %297 by %c32_i32_137 dim 1 : vector<8x128xf32>, i32 -> vector<8x128xf32>
    %301 = arith.mulf %298, %256 : vector<8x128xf32>
    %302 = arith.mulf %297, %300 : vector<8x128xf32>
    %303 = arith.addf %301, %302 : vector<8x128xf32>
    %304 = math.tanh %303 : vector<8x128xf32>
    %305 = arith.mulf %299, %304 : vector<8x128xf32>
    %c3_138 = arith.constant 3 : index
    %c0_139 = arith.constant 0 : index
    %c0_140 = arith.constant 0 : index
    %306 = vector.load %arg5[%c3_138, %c0_139, %c0_140] : memref<8x8x128xf32, #tpu.memory_space<vmem>>, vector<1x8x128xf32>
    %307 = vector.shape_cast %306 : vector<1x8x128xf32> to vector<8x128xf32>
    %308 = arith.subf %303, %256 : vector<8x128xf32>
    %309 = arith.mulf %307, %308 : vector<8x128xf32>
    %310 = arith.addf %256, %309 : vector<8x128xf32>
    %311 = arith.subf %305, %259 : vector<8x128xf32>
    %312 = arith.mulf %307, %311 : vector<8x128xf32>
    %313 = arith.addf %259, %312 : vector<8x128xf32>
    %314 = tpu.concatenate %288, %313 in 1 : vector<8x128xf32>, vector<8x128xf32> -> vector<8x256xf32>
    %cst_141 = arith.constant dense<0.000000e+00> : vector<8x256xf32>
    %315 = tpu.matmul %314, %61, %cst_141 {dimension_numbers = #tpu.dot_dimension_numbers<[1], [0], [0], [1], [0, 0, 1, 1], [], []>} : vector<8x256xf32>, vector<256x256xf32>, vector<8x256xf32> -> vector<8x256xf32>
    %316 = vector.extract_strided_slice %315 {offsets = [0, 0], sizes = [8, 128], strides = [1, 1]} : vector<8x256xf32> to vector<8x128xf32>
    %c5_142 = arith.constant 5 : index
    %c0_143 = arith.constant 0 : index
    %c0_144 = arith.constant 0 : index
    %317 = vector.load %arg7[%c5_142, %c0_143, %c0_144] : memref<8x8x128xf32, #tpu.memory_space<vmem>>, vector<1x8x128xf32>
    %318 = vector.shape_cast %317 : vector<1x8x128xf32> to vector<8x128xf32>
    %319 = arith.addf %316, %318 : vector<8x128xf32>
    %320 = math.tanh %319 : vector<8x128xf32>
    %321 = arith.negf %319 : vector<8x128xf32>
    %322 = math.exp %321 : vector<8x128xf32>
    %cst_145 = arith.constant 1.000000e+00 : f32
    %323 = vector.broadcast %cst_145 : f32 to vector<8x128xf32>
    %324 = arith.addf %323, %322 : vector<8x128xf32>
    %325 = arith.divf %323, %324 : vector<8x128xf32>
    %326 = arith.select %64, %320, %325 : vector<8x128xi1>, vector<8x128xf32>
    %c96_i32_146 = arith.constant 96 : i32
    %327 = tpu.dynamic_rotate %326 by %c96_i32_146 dim 1 : vector<8x128xf32>, i32 -> vector<8x128xf32>
    %c64_i32_147 = arith.constant 64 : i32
    %328 = tpu.dynamic_rotate %326 by %c64_i32_147 dim 1 : vector<8x128xf32>, i32 -> vector<8x128xf32>
    %c32_i32_148 = arith.constant 32 : i32
    %329 = tpu.dynamic_rotate %326 by %c32_i32_148 dim 1 : vector<8x128xf32>, i32 -> vector<8x128xf32>
    %330 = arith.mulf %327, %285 : vector<8x128xf32>
    %331 = arith.mulf %326, %329 : vector<8x128xf32>
    %332 = arith.addf %330, %331 : vector<8x128xf32>
    %333 = math.tanh %332 : vector<8x128xf32>
    %334 = arith.mulf %328, %333 : vector<8x128xf32>
    %c5_149 = arith.constant 5 : index
    %c0_150 = arith.constant 0 : index
    %c0_151 = arith.constant 0 : index
    %335 = vector.load %arg5[%c5_149, %c0_150, %c0_151] : memref<8x8x128xf32, #tpu.memory_space<vmem>>, vector<1x8x128xf32>
    %336 = vector.shape_cast %335 : vector<1x8x128xf32> to vector<8x128xf32>
    %337 = arith.subf %332, %285 : vector<8x128xf32>
    %338 = arith.mulf %336, %337 : vector<8x128xf32>
    %339 = arith.addf %285, %338 : vector<8x128xf32>
    %340 = arith.subf %334, %288 : vector<8x128xf32>
    %341 = arith.mulf %336, %340 : vector<8x128xf32>
    %342 = arith.addf %288, %341 : vector<8x128xf32>
    %343 = vector.extract_strided_slice %315 {offsets = [0, 128], sizes = [8, 128], strides = [1, 1]} : vector<8x256xf32> to vector<8x128xf32>
    %344 = arith.addf %343, %68 : vector<8x128xf32>
    %345 = math.tanh %344 : vector<8x128xf32>
    %346 = arith.negf %344 : vector<8x128xf32>
    %347 = math.exp %346 : vector<8x128xf32>
    %cst_152 = arith.constant 1.000000e+00 : f32
    %348 = vector.broadcast %cst_152 : f32 to vector<8x128xf32>
    %349 = arith.addf %348, %347 : vector<8x128xf32>
    %350 = arith.divf %348, %349 : vector<8x128xf32>
    %351 = arith.select %64, %345, %350 : vector<8x128xi1>, vector<8x128xf32>
    %c96_i32_153 = arith.constant 96 : i32
    %352 = tpu.dynamic_rotate %351 by %c96_i32_153 dim 1 : vector<8x128xf32>, i32 -> vector<8x128xf32>
    %c64_i32_154 = arith.constant 64 : i32
    %353 = tpu.dynamic_rotate %351 by %c64_i32_154 dim 1 : vector<8x128xf32>, i32 -> vector<8x128xf32>
    %c32_i32_155 = arith.constant 32 : i32
    %354 = tpu.dynamic_rotate %351 by %c32_i32_155 dim 1 : vector<8x128xf32>, i32 -> vector<8x128xf32>
    %355 = arith.mulf %352, %310 : vector<8x128xf32>
    %356 = arith.mulf %351, %354 : vector<8x128xf32>
    %357 = arith.addf %355, %356 : vector<8x128xf32>
    %358 = math.tanh %357 : vector<8x128xf32>
    %359 = arith.mulf %353, %358 : vector<8x128xf32>
    %c4_156 = arith.constant 4 : index
    %c0_157 = arith.constant 0 : index
    %c0_158 = arith.constant 0 : index
    %360 = vector.load %arg5[%c4_156, %c0_157, %c0_158] : memref<8x8x128xf32, #tpu.memory_space<vmem>>, vector<1x8x128xf32>
    %361 = vector.shape_cast %360 : vector<1x8x128xf32> to vector<8x128xf32>
    %362 = arith.subf %357, %310 : vector<8x128xf32>
    %363 = arith.mulf %361, %362 : vector<8x128xf32>
    %364 = arith.addf %310, %363 : vector<8x128xf32>
    %365 = arith.subf %359, %313 : vector<8x128xf32>
    %366 = arith.mulf %361, %365 : vector<8x128xf32>
    %367 = arith.addf %313, %366 : vector<8x128xf32>
    %368 = tpu.concatenate %342, %367 in 1 : vector<8x128xf32>, vector<8x128xf32> -> vector<8x256xf32>
    %cst_159 = arith.constant dense<0.000000e+00> : vector<8x256xf32>
    %369 = tpu.matmul %368, %61, %cst_159 {dimension_numbers = #tpu.dot_dimension_numbers<[1], [0], [0], [1], [0, 0, 1, 1], [], []>} : vector<8x256xf32>, vector<256x256xf32>, vector<8x256xf32> -> vector<8x256xf32>
    %370 = vector.extract_strided_slice %369 {offsets = [0, 0], sizes = [8, 128], strides = [1, 1]} : vector<8x256xf32> to vector<8x128xf32>
    %c6_160 = arith.constant 6 : index
    %c0_161 = arith.constant 0 : index
    %c0_162 = arith.constant 0 : index
    %371 = vector.load %arg7[%c6_160, %c0_161, %c0_162] : memref<8x8x128xf32, #tpu.memory_space<vmem>>, vector<1x8x128xf32>
    %372 = vector.shape_cast %371 : vector<1x8x128xf32> to vector<8x128xf32>
    %373 = arith.addf %370, %372 : vector<8x128xf32>
    %374 = math.tanh %373 : vector<8x128xf32>
    %375 = arith.negf %373 : vector<8x128xf32>
    %376 = math.exp %375 : vector<8x128xf32>
    %cst_163 = arith.constant 1.000000e+00 : f32
    %377 = vector.broadcast %cst_163 : f32 to vector<8x128xf32>
    %378 = arith.addf %377, %376 : vector<8x128xf32>
    %379 = arith.divf %377, %378 : vector<8x128xf32>
    %380 = arith.select %64, %374, %379 : vector<8x128xi1>, vector<8x128xf32>
    %c96_i32_164 = arith.constant 96 : i32
    %381 = tpu.dynamic_rotate %380 by %c96_i32_164 dim 1 : vector<8x128xf32>, i32 -> vector<8x128xf32>
    %c64_i32_165 = arith.constant 64 : i32
    %382 = tpu.dynamic_rotate %380 by %c64_i32_165 dim 1 : vector<8x128xf32>, i32 -> vector<8x128xf32>
    %c32_i32_166 = arith.constant 32 : i32
    %383 = tpu.dynamic_rotate %380 by %c32_i32_166 dim 1 : vector<8x128xf32>, i32 -> vector<8x128xf32>
    %384 = arith.mulf %381, %339 : vector<8x128xf32>
    %385 = arith.mulf %380, %383 : vector<8x128xf32>
    %386 = arith.addf %384, %385 : vector<8x128xf32>
    %387 = math.tanh %386 : vector<8x128xf32>
    %388 = arith.mulf %382, %387 : vector<8x128xf32>
    %c6_167 = arith.constant 6 : index
    %c0_168 = arith.constant 0 : index
    %c0_169 = arith.constant 0 : index
    %389 = vector.load %arg5[%c6_167, %c0_168, %c0_169] : memref<8x8x128xf32, #tpu.memory_space<vmem>>, vector<1x8x128xf32>
    %390 = vector.shape_cast %389 : vector<1x8x128xf32> to vector<8x128xf32>
    %391 = arith.subf %386, %339 : vector<8x128xf32>
    %392 = arith.mulf %390, %391 : vector<8x128xf32>
    %393 = arith.addf %339, %392 : vector<8x128xf32>
    %394 = arith.subf %388, %342 : vector<8x128xf32>
    %395 = arith.mulf %390, %394 : vector<8x128xf32>
    %396 = arith.addf %342, %395 : vector<8x128xf32>
    %397 = vector.extract_strided_slice %369 {offsets = [0, 128], sizes = [8, 128], strides = [1, 1]} : vector<8x256xf32> to vector<8x128xf32>
    %398 = arith.addf %397, %68 : vector<8x128xf32>
    %399 = math.tanh %398 : vector<8x128xf32>
    %400 = arith.negf %398 : vector<8x128xf32>
    %401 = math.exp %400 : vector<8x128xf32>
    %cst_170 = arith.constant 1.000000e+00 : f32
    %402 = vector.broadcast %cst_170 : f32 to vector<8x128xf32>
    %403 = arith.addf %402, %401 : vector<8x128xf32>
    %404 = arith.divf %402, %403 : vector<8x128xf32>
    %405 = arith.select %64, %399, %404 : vector<8x128xi1>, vector<8x128xf32>
    %c96_i32_171 = arith.constant 96 : i32
    %406 = tpu.dynamic_rotate %405 by %c96_i32_171 dim 1 : vector<8x128xf32>, i32 -> vector<8x128xf32>
    %c64_i32_172 = arith.constant 64 : i32
    %407 = tpu.dynamic_rotate %405 by %c64_i32_172 dim 1 : vector<8x128xf32>, i32 -> vector<8x128xf32>
    %c32_i32_173 = arith.constant 32 : i32
    %408 = tpu.dynamic_rotate %405 by %c32_i32_173 dim 1 : vector<8x128xf32>, i32 -> vector<8x128xf32>
    %409 = arith.mulf %406, %364 : vector<8x128xf32>
    %410 = arith.mulf %405, %408 : vector<8x128xf32>
    %411 = arith.addf %409, %410 : vector<8x128xf32>
    %412 = math.tanh %411 : vector<8x128xf32>
    %413 = arith.mulf %407, %412 : vector<8x128xf32>
    %c5_174 = arith.constant 5 : index
    %c0_175 = arith.constant 0 : index
    %c0_176 = arith.constant 0 : index
    %414 = vector.load %arg5[%c5_174, %c0_175, %c0_176] : memref<8x8x128xf32, #tpu.memory_space<vmem>>, vector<1x8x128xf32>
    %415 = vector.shape_cast %414 : vector<1x8x128xf32> to vector<8x128xf32>
    %416 = arith.subf %411, %364 : vector<8x128xf32>
    %417 = arith.mulf %415, %416 : vector<8x128xf32>
    %418 = arith.addf %364, %417 : vector<8x128xf32>
    %419 = arith.subf %413, %367 : vector<8x128xf32>
    %420 = arith.mulf %415, %419 : vector<8x128xf32>
    %421 = arith.addf %367, %420 : vector<8x128xf32>
    %422 = tpu.concatenate %396, %421 in 1 : vector<8x128xf32>, vector<8x128xf32> -> vector<8x256xf32>
    %cst_177 = arith.constant dense<0.000000e+00> : vector<8x256xf32>
    %423 = tpu.matmul %422, %61, %cst_177 {dimension_numbers = #tpu.dot_dimension_numbers<[1], [0], [0], [1], [0, 0, 1, 1], [], []>} : vector<8x256xf32>, vector<256x256xf32>, vector<8x256xf32> -> vector<8x256xf32>
    %424 = vector.extract_strided_slice %423 {offsets = [0, 0], sizes = [8, 128], strides = [1, 1]} : vector<8x256xf32> to vector<8x128xf32>
    %c7_178 = arith.constant 7 : index
    %c0_179 = arith.constant 0 : index
    %c0_180 = arith.constant 0 : index
    %425 = vector.load %arg7[%c7_178, %c0_179, %c0_180] : memref<8x8x128xf32, #tpu.memory_space<vmem>>, vector<1x8x128xf32>
    %426 = vector.shape_cast %425 : vector<1x8x128xf32> to vector<8x128xf32>
    %427 = arith.addf %424, %426 : vector<8x128xf32>
    %428 = math.tanh %427 : vector<8x128xf32>
    %429 = arith.negf %427 : vector<8x128xf32>
    %430 = math.exp %429 : vector<8x128xf32>
    %cst_181 = arith.constant 1.000000e+00 : f32
    %431 = vector.broadcast %cst_181 : f32 to vector<8x128xf32>
    %432 = arith.addf %431, %430 : vector<8x128xf32>
    %433 = arith.divf %431, %432 : vector<8x128xf32>
    %434 = arith.select %64, %428, %433 : vector<8x128xi1>, vector<8x128xf32>
    %c96_i32_182 = arith.constant 96 : i32
    %435 = tpu.dynamic_rotate %434 by %c96_i32_182 dim 1 : vector<8x128xf32>, i32 -> vector<8x128xf32>
    %c64_i32_183 = arith.constant 64 : i32
    %436 = tpu.dynamic_rotate %434 by %c64_i32_183 dim 1 : vector<8x128xf32>, i32 -> vector<8x128xf32>
    %c32_i32_184 = arith.constant 32 : i32
    %437 = tpu.dynamic_rotate %434 by %c32_i32_184 dim 1 : vector<8x128xf32>, i32 -> vector<8x128xf32>
    %438 = arith.mulf %435, %393 : vector<8x128xf32>
    %439 = arith.mulf %434, %437 : vector<8x128xf32>
    %440 = arith.addf %438, %439 : vector<8x128xf32>
    %441 = math.tanh %440 : vector<8x128xf32>
    %442 = arith.mulf %436, %441 : vector<8x128xf32>
    %c7_185 = arith.constant 7 : index
    %c0_186 = arith.constant 0 : index
    %c0_187 = arith.constant 0 : index
    %443 = vector.load %arg5[%c7_185, %c0_186, %c0_187] : memref<8x8x128xf32, #tpu.memory_space<vmem>>, vector<1x8x128xf32>
    %444 = vector.shape_cast %443 : vector<1x8x128xf32> to vector<8x128xf32>
    %445 = arith.subf %442, %396 : vector<8x128xf32>
    %446 = arith.mulf %444, %445 : vector<8x128xf32>
    %447 = arith.addf %396, %446 : vector<8x128xf32>
    %448 = vector.extract_strided_slice %423 {offsets = [0, 128], sizes = [8, 128], strides = [1, 1]} : vector<8x256xf32> to vector<8x128xf32>
    %449 = arith.addf %448, %68 : vector<8x128xf32>
    %450 = math.tanh %449 : vector<8x128xf32>
    %451 = arith.negf %449 : vector<8x128xf32>
    %452 = math.exp %451 : vector<8x128xf32>
    %cst_188 = arith.constant 1.000000e+00 : f32
    %453 = vector.broadcast %cst_188 : f32 to vector<8x128xf32>
    %454 = arith.addf %453, %452 : vector<8x128xf32>
    %455 = arith.divf %453, %454 : vector<8x128xf32>
    %456 = arith.select %64, %450, %455 : vector<8x128xi1>, vector<8x128xf32>
    %c96_i32_189 = arith.constant 96 : i32
    %457 = tpu.dynamic_rotate %456 by %c96_i32_189 dim 1 : vector<8x128xf32>, i32 -> vector<8x128xf32>
    %c64_i32_190 = arith.constant 64 : i32
    %458 = tpu.dynamic_rotate %456 by %c64_i32_190 dim 1 : vector<8x128xf32>, i32 -> vector<8x128xf32>
    %c32_i32_191 = arith.constant 32 : i32
    %459 = tpu.dynamic_rotate %456 by %c32_i32_191 dim 1 : vector<8x128xf32>, i32 -> vector<8x128xf32>
    %460 = arith.mulf %457, %418 : vector<8x128xf32>
    %461 = arith.mulf %456, %459 : vector<8x128xf32>
    %462 = arith.addf %460, %461 : vector<8x128xf32>
    %463 = math.tanh %462 : vector<8x128xf32>
    %464 = arith.mulf %458, %463 : vector<8x128xf32>
    %c6_192 = arith.constant 6 : index
    %c0_193 = arith.constant 0 : index
    %c0_194 = arith.constant 0 : index
    %465 = vector.load %arg5[%c6_192, %c0_193, %c0_194] : memref<8x8x128xf32, #tpu.memory_space<vmem>>, vector<1x8x128xf32>
    %466 = vector.shape_cast %465 : vector<1x8x128xf32> to vector<8x128xf32>
    %467 = arith.subf %462, %418 : vector<8x128xf32>
    %468 = arith.mulf %466, %467 : vector<8x128xf32>
    %469 = arith.addf %418, %468 : vector<8x128xf32>
    %470 = arith.subf %464, %421 : vector<8x128xf32>
    %471 = arith.mulf %466, %470 : vector<8x128xf32>
    %472 = arith.addf %421, %471 : vector<8x128xf32>
    %473 = tpu.concatenate %447, %472 in 1 : vector<8x128xf32>, vector<8x128xf32> -> vector<8x256xf32>
    %cst_195 = arith.constant dense<0.000000e+00> : vector<8x256xf32>
    %474 = tpu.matmul %473, %61, %cst_195 {dimension_numbers = #tpu.dot_dimension_numbers<[1], [0], [0], [1], [0, 0, 1, 1], [], []>} : vector<8x256xf32>, vector<256x256xf32>, vector<8x256xf32> -> vector<8x256xf32>
    %475 = vector.extract_strided_slice %474 {offsets = [0, 128], sizes = [8, 128], strides = [1, 1]} : vector<8x256xf32> to vector<8x128xf32>
    %476 = arith.addf %475, %68 : vector<8x128xf32>
    %477 = math.tanh %476 : vector<8x128xf32>
    %478 = arith.negf %476 : vector<8x128xf32>
    %479 = math.exp %478 : vector<8x128xf32>
    %cst_196 = arith.constant 1.000000e+00 : f32
    %480 = vector.broadcast %cst_196 : f32 to vector<8x128xf32>
    %481 = arith.addf %480, %479 : vector<8x128xf32>
    %482 = arith.divf %480, %481 : vector<8x128xf32>
    %483 = arith.select %64, %477, %482 : vector<8x128xi1>, vector<8x128xf32>
    %c96_i32_197 = arith.constant 96 : i32
    %484 = tpu.dynamic_rotate %483 by %c96_i32_197 dim 1 : vector<8x128xf32>, i32 -> vector<8x128xf32>
    %c64_i32_198 = arith.constant 64 : i32
    %485 = tpu.dynamic_rotate %483 by %c64_i32_198 dim 1 : vector<8x128xf32>, i32 -> vector<8x128xf32>
    %c32_i32_199 = arith.constant 32 : i32
    %486 = tpu.dynamic_rotate %483 by %c32_i32_199 dim 1 : vector<8x128xf32>, i32 -> vector<8x128xf32>
    %487 = arith.mulf %484, %469 : vector<8x128xf32>
    %488 = arith.mulf %483, %486 : vector<8x128xf32>
    %489 = arith.addf %487, %488 : vector<8x128xf32>
    %490 = math.tanh %489 : vector<8x128xf32>
    %491 = arith.mulf %485, %490 : vector<8x128xf32>
    %c7_200 = arith.constant 7 : index
    %c0_201 = arith.constant 0 : index
    %c0_202 = arith.constant 0 : index
    %492 = vector.load %arg5[%c7_200, %c0_201, %c0_202] : memref<8x8x128xf32, #tpu.memory_space<vmem>>, vector<1x8x128xf32>
    %493 = vector.shape_cast %492 : vector<1x8x128xf32> to vector<8x128xf32>
    %494 = arith.subf %491, %472 : vector<8x128xf32>
    %495 = arith.mulf %493, %494 : vector<8x128xf32>
    %496 = arith.addf %472, %495 : vector<8x128xf32>
    %c0_203 = arith.constant 0 : index
    %c0_204 = arith.constant 0 : index
    %497 = vector.load %arg6[%c0_203, %c0_204] : memref<8x128xf32, #tpu.memory_space<vmem>>, vector<8x128xf32>
    tpu.vector_store %arg6[%c0_203, %c0_204], %496 {strides = array<i32>} : memref<8x128xf32, #tpu.memory_space<vmem>>, vector<8x128xf32>,
    return
  }
  func.func @transform_0(%arg0: i32) -> (i32, i32, i32) {
    %c0_i32 = arith.constant 0 : i32
    %c0_i32_0 = arith.constant 0 : i32
    %c0_i32_1 = arith.constant 0 : i32
    return %c0_i32, %arg0, %c0_i32_0 : i32, i32, i32
  }
  func.func @transform_1(%arg0: i32) -> (i32, i32) {
    %c0_i32 = arith.constant 0 : i32
    %c0_i32_0 = arith.constant 0 : i32
    %c0_i32_1 = arith.constant 0 : i32
    return %c0_i32, %c0_i32_0 : i32, i32
  }
  func.func @transform_2(%arg0: i32) -> (i32, i32) {
    %c0_i32 = arith.constant 0 : i32
    %c0_i32_0 = arith.constant 0 : i32
    %c0_i32_1 = arith.constant 0 : i32
    return %c0_i32, %c0_i32_0 : i32, i32
  }
  func.func @transform_3(%arg0: i32) -> (i32, i32, i32) {
    %c0_i32 = arith.constant 0 : i32
    %c0_i32_0 = arith.constant 0 : i32
    %c0_i32_1 = arith.constant 0 : i32
    %c0_i32_2 = arith.constant 0 : i32
    return %c0_i32, %c0_i32_0, %c0_i32_1 : i32, i32, i32
  }
  func.func @transform_4(%arg0: i32) -> (i32, i32, i32) {
    %c0_i32 = arith.constant 0 : i32
    %c0_i32_0 = arith.constant 0 : i32
    %c0_i32_1 = arith.constant 0 : i32
    return %c0_i32, %arg0, %c0_i32_0 : i32, i32, i32
  }
  func.func @transform_5(%arg0: i32) -> (i32, i32) {
    %c0_i32 = arith.constant 0 : i32
    %c0_i32_0 = arith.constant 0 : i32
    return %arg0, %c0_i32 : i32, i32
  }
}

</mosaic_0001>

<llo_original>
// kernel: tpu_custom_call.1
$region0: #{tpu_custom_call.1}
  #allocation0 [shape = 'u32[]', space=smem, size = 0x4, offset = 0x4, fixed_abs, tag = 'smem constant byte address 0x4 - core index']
  #allocation1 [shape = 'u32[144,128]{1,0:T(1,128)}', space=vmem, size = 0x12000, scoped, tag = 'internal scratch']
  #allocation2 [shape = 'f32[8,8,128]{2,1,0:T(8,128)}', space=vmem, size = 0x8000, scoped, tag = 'scratch operand']
  %s0 = inlined_call_operand.hbm [shape: f32[8,8,32], index: 0, kind: input, shape index: {}]
  %s1 = inlined_call_operand.hbm [shape: f32[32,128], index: 1, kind: input, shape index: {}]
  %s2 = inlined_call_operand.hbm [shape: f32[256,256], index: 2, kind: input, shape index: {}]
  %s3 = inlined_call_operand.vmem [shape: f32[2,1,128], index: 3, kind: input, shape index: {}]
  %s4 = inlined_call_operand.hbm [shape: f32[8,8,128], index: 4, kind: input, shape index: {}]
  %s5 = inlined_call_operand.hbm [shape: f32[8,128], index: 5, kind: output, shape index: {}]
  %s6 = sld [smem:[#allocation0]]
  $region46: #{tpu_custom_call.1} parent=0
    _
  %s8 = ssub.s32 1, %s6
  %s9 = scalar_select 0, %s8, %s6
  $region1: #{tpu_custom_call.1} parent=0
    #allocation3 [shape = 'u8[32768]{0}', space=vmem, size = 0x8000, scoped, tag = 'input window, operand 0, single buffered']
    #allocation4 [shape = 's32[1]{0}', space=sflag, size = 0x4, scoped, tag = 'scoped memory for tpu_custom_call.1']
    #allocation5 [shape = 's32[1]{0}', space=sflag, size = 0x4, scoped, tag = 'scoped memory for tpu_custom_call.1']
    #allocation6 [shape = 'u8[16384]{0}', space=vmem, size = 0x4000, scoped, tag = 'input window, operand 1, single buffered']
    #allocation7 [shape = 's32[1]{0}', space=sflag, size = 0x4, scoped, tag = 'scoped memory for tpu_custom_call.1']
    #allocation8 [shape = 'u8[262144]{0}', space=vmem, size = 0x40000, scoped, tag = 'input window, operand 2, single buffered']
    #allocation9 [shape = 'u8[32768]{0}', space=vmem, size = 0x8000, scoped, tag = 'input window, operand 4, single buffered']
    #allocation10 [shape = 's32[1]{0}', space=sflag, size = 0x4, scoped, tag = 'scoped memory for tpu_custom_call.1']
    #allocation11 [shape = 'u8[4096]{0}', space=vmem, size = 0x1000, scoped, tag = 'output window, operand 0, single buffered']
    %10 = vsyncpa [#allocation4], 0
    %11 = vsyncpa [#allocation7], 0
    %12 = vsyncpa [#allocation10], 0
    %13 = vsyncpa [#allocation5], 0
    // Predicated region
    $region2: #{tpu_custom_call.1} parent=1 // pred_check
      _
    $region3: #{tpu_custom_call.1} parent=1 // pred_check_branch
      %15 = sbr.rel (0) target = $region5
    $region4: #{tpu_custom_call.1} parent=1 // pred_region
      %s17 = ssub.s32 1024, 1024
      %18 = vsyncadd [#allocation4], %s17
      %s19 = sshll.u32 [#allocation3], 4
      %s20 = int_to_ptr.vmem [resolvable:$true] %s19
      %25 = dma.hbm_to_vmem [thread:$0]  %s0, 1024, %s20, [#allocation4], 128, 128, 8
    $region5: #{tpu_custom_call.1} parent=1 // pred_fallthru
      _
    // Predicated region
    $region6: #{tpu_custom_call.1} parent=1 // pred_check
      _
    $region7: #{tpu_custom_call.1} parent=1 // pred_check_branch
      %27 = sbr.rel (0) target = $region9
    $region8: #{tpu_custom_call.1} parent=1 // pred_region
      %s29 = ssub.s32 512, 512
      %30 = vsyncadd [#allocation7], %s29
      %s31 = sshll.u32 [#allocation6], 4
      %s32 = int_to_ptr.vmem [resolvable:$true] %s31
      %37 = dma.hbm_to_vmem [thread:$0]  %s1, 512, %s32, [#allocation7], 128, 128, 8
    $region9: #{tpu_custom_call.1} parent=1 // pred_fallthru
      _
    // Predicated region
    $region10: #{tpu_custom_call.1} parent=1 // pred_check
      _
    $region11: #{tpu_custom_call.1} parent=1 // pred_check_branch
      %39 = sbr.rel (0) target = $region13
    $region12: #{tpu_custom_call.1} parent=1 // pred_region
      %s41 = ssub.s32 8192, 8192
      %42 = vsyncadd [#allocation7], %s41
      %s43 = sshll.u32 [#allocation8], 4
      %s44 = int_to_ptr.vmem [resolvable:$true] %s43
      %49 = dma.hbm_to_vmem [thread:$0]  %s2, 8192, %s44, [#allocation7], 256, 256, 16
    $region13: #{tpu_custom_call.1} parent=1 // pred_fallthru
      _
    // Predicated region
    $region14: #{tpu_custom_call.1} parent=1 // pred_check
      _
    $region15: #{tpu_custom_call.1} parent=1 // pred_check_branch
      %51 = sbr.rel (0) target = $region17
    $region16: #{tpu_custom_call.1} parent=1 // pred_region
      _
    $region17: #{tpu_custom_call.1} parent=1 // pred_fallthru
      _
    // Predicated region
    $region18: #{tpu_custom_call.1} parent=1 // pred_check
      _
    $region19: #{tpu_custom_call.1} parent=1 // pred_check_branch
      %53 = sbr.rel (0) target = $region21
    $region20: #{tpu_custom_call.1} parent=1 // pred_region
      %s55 = ssub.s32 1024, 1024
      %56 = vsyncadd [#allocation10], %s55
      %s57 = sshll.u32 [#allocation9], 4
      %s58 = int_to_ptr.vmem [resolvable:$true] %s57
      %63 = dma.hbm_to_vmem [thread:$0]  %s4, 1024, %s58, [#allocation10], 128, 128, 8
    $region21: #{tpu_custom_call.1} parent=1 // pred_fallthru
      _
    // Predicated region
    $region22: #{tpu_custom_call.1} parent=1 // pred_check
      _
    $region23: #{tpu_custom_call.1} parent=1 // pred_check_branch
      %65 = sbr.rel (0) target = $region25
    $region24: #{tpu_custom_call.1} parent=1 // pred_region
      %66 = dma.done [#allocation4], 1024
    $region25: #{tpu_custom_call.1} parent=1 // pred_fallthru
      _
    // Predicated region
    $region26: #{tpu_custom_call.1} parent=1 // pred_check
      _
    $region27: #{tpu_custom_call.1} parent=1 // pred_check_branch
      %68 = sbr.rel (0) target = $region29
    $region28: #{tpu_custom_call.1} parent=1 // pred_region
      %69 = dma.done [#allocation7], 512
    $region29: #{tpu_custom_call.1} parent=1 // pred_fallthru
      _
    // Predicated region
    $region30: #{tpu_custom_call.1} parent=1 // pred_check
      _
    $region31: #{tpu_custom_call.1} parent=1 // pred_check_branch
      %71 = sbr.rel (0) target = $region33
    $region32: #{tpu_custom_call.1} parent=1 // pred_region
      %72 = dma.done [#allocation7], 8192
    $region33: #{tpu_custom_call.1} parent=1 // pred_fallthru
      _
    // Predicated region
    $region34: #{tpu_custom_call.1} parent=1 // pred_check
      _
    $region35: #{tpu_custom_call.1} parent=1 // pred_check_branch
      %74 = sbr.rel (0) target = $region37
    $region36: #{tpu_custom_call.1} parent=1 // pred_region
      %75 = dma.done [#allocation10], 1024
    $region37: #{tpu_custom_call.1} parent=1 // pred_fallthru
      _
    %v76 = vld [vmem:[#allocation6] sm:$0xff]
    %v77 = vld [vmem:[#allocation6 + $0x8] sm:$0xff]
    %v78 = vld [vmem:[#allocation6 + $0x10] sm:$0xff]
    %v79 = vld [vmem:[#allocation6 + $0x18] sm:$0xff]
    %v80 = vld [vmem:[%s3] sm:$0x1]
    %v82 = vlaneseq
    %v83 = vshrl.u32 %v82, 7
    %v84 = vsub.s32 0, %v83
    %v85 = vrot.slane %v80, %v84
    %v87 = vld [vmem:[#allocation3] sm:$0xff]
    %vm88 = vcmask 261120
    %v90 = vsel %vm88, %v87, 0
    %92 = vmatprep.subr.mxu0 0.0
    %93 = vmatpush1.msra.mxu0 0.0
    %94 = vmatprep.subr.mxu0 0.0
    %95 = vmatpush1.msra.mxu0 0.0
    %96 = vmatprep.subr.mxu0 0.0
    %97 = vmatpush1.msra.mxu0 0.0
    %98 = vmatprep.subr.mxu0 0.0
    %99 = vmatpush1.msra.mxu0 0.0
    %100 = vmatprep.subr.mxu0 0.0
    %101 = vmatpush1.msra.mxu0 0.0
    %102 = vmatprep.subr.mxu0 0.0
    %103 = vmatpush1.msra.mxu0 0.0
    %104 = vmatprep.subr.mxu0 0.0
    %105 = vmatpush1.msra.mxu0 0.0
    %106 = vmatprep.subr.mxu0 0.0
    %107 = vmatpush1.msra.mxu0 0.0
    %108 = vmatprep.subr.mxu0 0.0
    %109 = vmatpush1.msra.mxu0 0.0
    %110 = vmatprep.subr.mxu0 0.0
    %111 = vmatpush1.msra.mxu0 0.0
    %112 = vmatprep.subr.mxu0 0.0
    %113 = vmatpush1.msra.mxu0 0.0
    %114 = vmatprep.subr.mxu0 0.0
    %115 = vmatpush1.msra.mxu0 0.0
    %116 = vmatprep.subr.mxu0 0.0
    %117 = vmatpush1.msra.mxu0 %v79
    %118 = vmatprep.subr.mxu0 0.0
    %119 = vmatpush1.msra.mxu0 %v78
    %120 = vmatprep.subr.mxu0 0.0
    %121 = vmatpush1.msra.mxu0 %v77
    %122 = vmatprep.subr.mxu0 0.0
    %123 = vmatpush1.msra.mxu0 %v76
    %124 = vmatprep.subr.mxu0 0.0
    %125 = vmatpush2.msra.mxu0 0.0
    %126 = vmatprep.subr.mxu0 0.0
    %127 = vmatpush2.msra.mxu0 0.0
    %128 = vmatprep.subr.mxu0 0.0
    %129 = vmatpush2.msra.mxu0 0.0
    %130 = vmatprep.subr.mxu0 0.0
    %131 = vmatpush2.msra.mxu0 0.0
    %132 = vmatprep.subr.mxu0 0.0
    %133 = vmatpush2.msra.mxu0 0.0
    %134 = vmatprep.subr.mxu0 0.0
    %135 = vmatpush2.msra.mxu0 0.0
    %136 = vmatprep.subr.mxu0 0.0
    %137 = vmatpush2.msra.mxu0 0.0
    %138 = vmatprep.subr.mxu0 0.0
    %139 = vmatpush2.msra.mxu0 0.0
    %140 = vmatprep.subr.mxu0 0.0
    %141 = vmatpush2.msra.mxu0 0.0
    %142 = vmatprep.subr.mxu0 0.0
    %143 = vmatpush2.msra.mxu0 0.0
    %144 = vmatprep.subr.mxu0 0.0
    %145 = vmatpush2.msra.mxu0 0.0
    %146 = vmatprep.subr.mxu0 0.0
    %147 = vmatpush2.msra.mxu0 0.0
    %148 = vmatprep.subr.mxu0 0.0
    %149 = vmatpush2.msra.mxu0 0.0
    %150 = vmatprep.subr.mxu0 0.0
    %151 = vmatpush2.msra.mxu0 0.0
    %152 = vmatprep.subr.mxu0 0.0
    %153 = vmatpush2.msra.mxu0 0.0
    %154 = vmatprep.subr.mxu0 0.0
    %155 = vmatpush2.msra.mxu0 0.0
    %156 = vmatprep.mubr.f32.mxu0 0.0
    %157 = vmatmul.mubr.f32.gmra.mxu0 %v90
    %v158 = vpop.f32.mrf.mxu0
    %v159 = vadd.f32 %v85, %v158
    %v160 = vpop.f32.mrf.mxu0
    %161 = vdwg.mxu0
    %162 = vst [vmem:[#allocation2] sm:$0xff] %v159
    %s163 = scalar_lea.vmem [#allocation3], 8
    %v164 = vld [vmem:[%s163] sm:$0xff]
    %v166 = vsel %vm88, %v164, 0
    %168 = vmatprep.subr.mxu0 0.0
    %169 = vmatpush1.msra.mxu0 0.0
    %170 = vmatprep.subr.mxu0 0.0
    %171 = vmatpush1.msra.mxu0 0.0
    %172 = vmatprep.subr.mxu0 0.0
    %173 = vmatpush1.msra.mxu0 0.0
    %174 = vmatprep.subr.mxu0 0.0
    %175 = vmatpush1.msra.mxu0 0.0
    %176 = vmatprep.subr.mxu0 0.0
    %177 = vmatpush1.msra.mxu0 0.0
    %178 = vmatprep.subr.mxu0 0.0
    %179 = vmatpush1.msra.mxu0 0.0
    %180 = vmatprep.subr.mxu0 0.0
    %181 = vmatpush1.msra.mxu0 0.0
    %182 = vmatprep.subr.mxu0 0.0
    %183 = vmatpush1.msra.mxu0 0.0
    %184 = vmatprep.subr.mxu0 0.0
    %185 = vmatpush1.msra.mxu0 0.0
    %186 = vmatprep.subr.mxu0 0.0
    %187 = vmatpush1.msra.mxu0 0.0
    %188 = vmatprep.subr.mxu0 0.0
    %189 = vmatpush1.msra.mxu0 0.0
    %190 = vmatprep.subr.mxu0 0.0
    %191 = vmatpush1.msra.mxu0 0.0
    %192 = vmatprep.subr.mxu0 0.0
    %193 = vmatpush1.msra.mxu0 %v79
    %194 = vmatprep.subr.mxu0 0.0
    %195 = vmatpush1.msra.mxu0 %v78
    %196 = vmatprep.subr.mxu0 0.0
    %197 = vmatpush1.msra.mxu0 %v77
    %198 = vmatprep.subr.mxu0 0.0
    %199 = vmatpush1.msra.mxu0 %v76
    %200 = vmatprep.subr.mxu0 0.0
    %201 = vmatpush2.msra.mxu0 0.0
    %202 = vmatprep.subr.mxu0 0.0
    %203 = vmatpush2.msra.mxu0 0.0
    %204 = vmatprep.subr.mxu0 0.0
    %205 = vmatpush2.msra.mxu0 0.0
    %206 = vmatprep.subr.mxu0 0.0
    %207 = vmatpush2.msra.mxu0 0.0
    %208 = vmatprep.subr.mxu0 0.0
    %209 = vmatpush2.msra.mxu0 0.0
    %210 = vmatprep.subr.mxu0 0.0
    %211 = vmatpush2.msra.mxu0 0.0
    %212 = vmatprep.subr.mxu0 0.0
    %213 = vmatpush2.msra.mxu0 0.0
    %214 = vmatprep.subr.mxu0 0.0
    %215 = vmatpush2.msra.mxu0 0.0
    %216 = vmatprep.subr.mxu0 0.0
    %217 = vmatpush2.msra.mxu0 0.0
    %218 = vmatprep.subr.mxu0 0.0
    %219 = vmatpush2.msra.mxu0 0.0
    %220 = vmatprep.subr.mxu0 0.0
    %221 = vmatpush2.msra.mxu0 0.0
    %222 = vmatprep.subr.mxu0 0.0
    %223 = vmatpush2.msra.mxu0 0.0
    %224 = vmatprep.subr.mxu0 0.0
    %225 = vmatpush2.msra.mxu0 0.0
    %226 = vmatprep.subr.mxu0 0.0
    %227 = vmatpush2.msra.mxu0 0.0
    %228 = vmatprep.subr.mxu0 0.0
    %229 = vmatpush2.msra.mxu0 0.0
    %230 = vmatprep.subr.mxu0 0.0
    %231 = vmatpush2.msra.mxu0 0.0
    %232 = vmatprep.mubr.f32.mxu0 0.0
    %233 = vmatmul.mubr.f32.gmra.mxu0 %v166
    %v234 = vpop.f32.mrf.mxu0
    %v235 = vadd.f32 %v85, %v234
    %v236 = vpop.f32.mrf.mxu0
    %237 = vdwg.mxu0
    %s238 = scalar_lea.vmem [#allocation2], 8
    %239 = vst [vmem:[%s238] sm:$0xff] %v235
    %s240 = scalar_lea.vmem [#allocation3], 16
    %v241 = vld [vmem:[%s240] sm:$0xff]
    %v243 = vsel %vm88, %v241, 0
    %245 = vmatprep.subr.mxu0 0.0
    %246 = vmatpush1.msra.mxu0 0.0
    %247 = vmatprep.subr.mxu0 0.0
    %248 = vmatpush1.msra.mxu0 0.0
    %249 = vmatprep.subr.mxu0 0.0
    %250 = vmatpush1.msra.mxu0 0.0
    %251 = vmatprep.subr.mxu0 0.0
    %252 = vmatpush1.msra.mxu0 0.0
    %253 = vmatprep.subr.mxu0 0.0
    %254 = vmatpush1.msra.mxu0 0.0
    %255 = vmatprep.subr.mxu0 0.0
    %256 = vmatpush1.msra.mxu0 0.0
    %257 = vmatprep.subr.mxu0 0.0
    %258 = vmatpush1.msra.mxu0 0.0
    %259 = vmatprep.subr.mxu0 0.0
    %260 = vmatpush1.msra.mxu0 0.0
    %261 = vmatprep.subr.mxu0 0.0
    %262 = vmatpush1.msra.mxu0 0.0
    %263 = vmatprep.subr.mxu0 0.0
    %264 = vmatpush1.msra.mxu0 0.0
    %265 = vmatprep.subr.mxu0 0.0
    %266 = vmatpush1.msra.mxu0 0.0
    %267 = vmatprep.subr.mxu0 0.0
    %268 = vmatpush1.msra.mxu0 0.0
    %269 = vmatprep.subr.mxu0 0.0
    %270 = vmatpush1.msra.mxu0 %v79
    %271 = vmatprep.subr.mxu0 0.0
    %272 = vmatpush1.msra.mxu0 %v78
    %273 = vmatprep.subr.mxu0 0.0
    %274 = vmatpush1.msra.mxu0 %v77
    %275 = vmatprep.subr.mxu0 0.0
    %276 = vmatpush1.msra.mxu0 %v76
    %277 = vmatprep.subr.mxu0 0.0
    %278 = vmatpush2.msra.mxu0 0.0
    %279 = vmatprep.subr.mxu0 0.0
    %280 = vmatpush2.msra.mxu0 0.0
    %281 = vmatprep.subr.mxu0 0.0
    %282 = vmatpush2.msra.mxu0 0.0
    %283 = vmatprep.subr.mxu0 0.0
    %284 = vmatpush2.msra.mxu0 0.0
    %285 = vmatprep.subr.mxu0 0.0
    %286 = vmatpush2.msra.mxu0 0.0
    %287 = vmatprep.subr.mxu0 0.0
    %288 = vmatpush2.msra.mxu0 0.0
    %289 = vmatprep.subr.mxu0 0.0
    %290 = vmatpush2.msra.mxu0 0.0
    %291 = vmatprep.subr.mxu0 0.0
    %292 = vmatpush2.msra.mxu0 0.0
    %293 = vmatprep.subr.mxu0 0.0
    %294 = vmatpush2.msra.mxu0 0.0
    %295 = vmatprep.subr.mxu0 0.0
    %296 = vmatpush2.msra.mxu0 0.0
    %297 = vmatprep.subr.mxu0 0.0
    %298 = vmatpush2.msra.mxu0 0.0
    %299 = vmatprep.subr.mxu0 0.0
    %300 = vmatpush2.msra.mxu0 0.0
    %301 = vmatprep.subr.mxu0 0.0
    %302 = vmatpush2.msra.mxu0 0.0
    %303 = vmatprep.subr.mxu0 0.0
    %304 = vmatpush2.msra.mxu0 0.0
    %305 = vmatprep.subr.mxu0 0.0
    %306 = vmatpush2.msra.mxu0 0.0
    %307 = vmatprep.subr.mxu0 0.0
    %308 = vmatpush2.msra.mxu0 0.0
    %309 = vmatprep.mubr.f32.mxu0 0.0
    %310 = vmatmul.mubr.f32.gmra.mxu0 %v243
    %v311 = vpop.f32.mrf.mxu0
    %v312 = vadd.f32 %v85, %v311
    %v313 = vpop.f32.mrf.mxu0
    %314 = vdwg.mxu0
    %s315 = scalar_lea.vmem [#allocation2], 16
    %316 = vst [vmem:[%s315] sm:$0xff] %v312
    %s317 = scalar_lea.vmem [#allocation3], 24
    %v318 = vld [vmem:[%s317] sm:$0xff]
    %v320 = vsel %vm88, %v318, 0
    %322 = vmatprep.subr.mxu0 0.0
    %323 = vmatpush1.msra.mxu0 0.0
    %324 = vmatprep.subr.mxu0 0.0
    %325 = vmatpush1.msra.mxu0 0.0
    %326 = vmatprep.subr.mxu0 0.0
    %327 = vmatpush1.msra.mxu0 0.0
    %328 = vmatprep.subr.mxu0 0.0
    %329 = vmatpush1.msra.mxu0 0.0
    %330 = vmatprep.subr.mxu0 0.0
    %331 = vmatpush1.msra.mxu0 0.0
    %332 = vmatprep.subr.mxu0 0.0
    %333 = vmatpush1.msra.mxu0 0.0
    %334 = vmatprep.subr.mxu0 0.0
    %335 = vmatpush1.msra.mxu0 0.0
    %336 = vmatprep.subr.mxu0 0.0
    %337 = vmatpush1.msra.mxu0 0.0
    %338 = vmatprep.subr.mxu0 0.0
    %339 = vmatpush1.msra.mxu0 0.0
    %340 = vmatprep.subr.mxu0 0.0
    %341 = vmatpush1.msra.mxu0 0.0
    %342 = vmatprep.subr.mxu0 0.0
    %343 = vmatpush1.msra.mxu0 0.0
    %344 = vmatprep.subr.mxu0 0.0
    %345 = vmatpush1.msra.mxu0 0.0
    %346 = vmatprep.subr.mxu0 0.0
    %347 = vmatpush1.msra.mxu0 %v79
    %348 = vmatprep.subr.mxu0 0.0
    %349 = vmatpush1.msra.mxu0 %v78
    %350 = vmatprep.subr.mxu0 0.0
    %351 = vmatpush1.msra.mxu0 %v77
    %352 = vmatprep.subr.mxu0 0.0
    %353 = vmatpush1.msra.mxu0 %v76
    %354 = vmatprep.subr.mxu0 0.0
    %355 = vmatpush2.msra.mxu0 0.0
    %356 = vmatprep.subr.mxu0 0.0
    %357 = vmatpush2.msra.mxu0 0.0
    %358 = vmatprep.subr.mxu0 0.0
    %359 = vmatpush2.msra.mxu0 0.0
    %360 = vmatprep.subr.mxu0 0.0
    %361 = vmatpush2.msra.mxu0 0.0
    %362 = vmatprep.subr.mxu0 0.0
    %363 = vmatpush2.msra.mxu0 0.0
    %364 = vmatprep.subr.mxu0 0.0
    %365 = vmatpush2.msra.mxu0 0.0
    %366 = vmatprep.subr.mxu0 0.0
    %367 = vmatpush2.msra.mxu0 0.0
    %368 = vmatprep.subr.mxu0 0.0
    %369 = vmatpush2.msra.mxu0 0.0
    %370 = vmatprep.subr.mxu0 0.0
    %371 = vmatpush2.msra.mxu0 0.0
    %372 = vmatprep.subr.mxu0 0.0
    %373 = vmatpush2.msra.mxu0 0.0
    %374 = vmatprep.subr.mxu0 0.0
    %375 = vmatpush2.msra.mxu0 0.0
    %376 = vmatprep.subr.mxu0 0.0
    %377 = vmatpush2.msra.mxu0 0.0
    %378 = vmatprep.subr.mxu0 0.0
    %379 = vmatpush2.msra.mxu0 0.0
    %380 = vmatprep.subr.mxu0 0.0
    %381 = vmatpush2.msra.mxu0 0.0
    %382 = vmatprep.subr.mxu0 0.0
    %383 = vmatpush2.msra.mxu0 0.0
    %384 = vmatprep.subr.mxu0 0.0
    %385 = vmatpush2.msra.mxu0 0.0
    %386 = vmatprep.mubr.f32.mxu0 0.0
    %387 = vmatmul.mubr.f32.gmra.mxu0 %v320
    %v388 = vpop.f32.mrf.mxu0
    %v389 = vadd.f32 %v85, %v388
    %v390 = vpop.f32.mrf.mxu0
    %391 = vdwg.mxu0
    %s392 = scalar_lea.vmem [#allocation2], 24
    %393 = vst [vmem:[%s392] sm:$0xff] %v389
    %s394 = scalar_lea.vmem [#allocation3], 32
    %v395 = vld [vmem:[%s394] sm:$0xff]
    %v397 = vsel %vm88, %v395, 0
    %399 = vmatprep.subr.mxu0 0.0
    %400 = vmatpush1.msra.mxu0 0.0
    %401 = vmatprep.subr.mxu0 0.0
    %402 = vmatpush1.msra.mxu0 0.0
    %403 = vmatprep.subr.mxu0 0.0
    %404 = vmatpush1.msra.mxu0 0.0
    %405 = vmatprep.subr.mxu0 0.0
    %406 = vmatpush1.msra.mxu0 0.0
    %407 = vmatprep.subr.mxu0 0.0
    %408 = vmatpush1.msra.mxu0 0.0
    %409 = vmatprep.subr.mxu0 0.0
    %410 = vmatpush1.msra.mxu0 0.0
    %411 = vmatprep.subr.mxu0 0.0
    %412 = vmatpush1.msra.mxu0 0.0
    %413 = vmatprep.subr.mxu0 0.0
    %414 = vmatpush1.msra.mxu0 0.0
    %415 = vmatprep.subr.mxu0 0.0
    %416 = vmatpush1.msra.mxu0 0.0
    %417 = vmatprep.subr.mxu0 0.0
    %418 = vmatpush1.msra.mxu0 0.0
    %419 = vmatprep.subr.mxu0 0.0
    %420 = vmatpush1.msra.mxu0 0.0
    %421 = vmatprep.subr.mxu0 0.0
    %422 = vmatpush1.msra.mxu0 0.0
    %423 = vmatprep.subr.mxu0 0.0
    %424 = vmatpush1.msra.mxu0 %v79
    %425 = vmatprep.subr.mxu0 0.0
    %426 = vmatpush1.msra.mxu0 %v78
    %427 = vmatprep.subr.mxu0 0.0
    %428 = vmatpush1.msra.mxu0 %v77
    %429 = vmatprep.subr.mxu0 0.0
    %430 = vmatpush1.msra.mxu0 %v76
    %431 = vmatprep.subr.mxu0 0.0
    %432 = vmatpush2.msra.mxu0 0.0
    %433 = vmatprep.subr.mxu0 0.0
    %434 = vmatpush2.msra.mxu0 0.0
    %435 = vmatprep.subr.mxu0 0.0
    %436 = vmatpush2.msra.mxu0 0.0
    %437 = vmatprep.subr.mxu0 0.0
    %438 = vmatpush2.msra.mxu0 0.0
    %439 = vmatprep.subr.mxu0 0.0
    %440 = vmatpush2.msra.mxu0 0.0
    %441 = vmatprep.subr.mxu0 0.0
    %442 = vmatpush2.msra.mxu0 0.0
    %443 = vmatprep.subr.mxu0 0.0
    %444 = vmatpush2.msra.mxu0 0.0
    %445 = vmatprep.subr.mxu0 0.0
    %446 = vmatpush2.msra.mxu0 0.0
    %447 = vmatprep.subr.mxu0 0.0
    %448 = vmatpush2.msra.mxu0 0.0
    %449 = vmatprep.subr.mxu0 0.0
    %450 = vmatpush2.msra.mxu0 0.0
    %451 = vmatprep.subr.mxu0 0.0
    %452 = vmatpush2.msra.mxu0 0.0
    %453 = vmatprep.subr.mxu0 0.0
    %454 = vmatpush2.msra.mxu0 0.0
    %455 = vmatprep.subr.mxu0 0.0
    %456 = vmatpush2.msra.mxu0 0.0
    %457 = vmatprep.subr.mxu0 0.0
    %458 = vmatpush2.msra.mxu0 0.0
    %459 = vmatprep.subr.mxu0 0.0
    %460 = vmatpush2.msra.mxu0 0.0
    %461 = vmatprep.subr.mxu0 0.0
    %462 = vmatpush2.msra.mxu0 0.0
    %463 = vmatprep.mubr.f32.mxu0 0.0
    %464 = vmatmul.mubr.f32.gmra.mxu0 %v397
    %v465 = vpop.f32.mrf.mxu0
    %v466 = vadd.f32 %v85, %v465
    %v467 = vpop.f32.mrf.mxu0
    %468 = vdwg.mxu0
    %s469 = scalar_lea.vmem [#allocation2], 32
    %470 = vst [vmem:[%s469] sm:$0xff] %v466
    %s471 = scalar_lea.vmem [#allocation3], 40
    %v472 = vld [vmem:[%s471] sm:$0xff]
    %v474 = vsel %vm88, %v472, 0
    %476 = vmatprep.subr.mxu0 0.0
    %477 = vmatpush1.msra.mxu0 0.0
    %478 = vmatprep.subr.mxu0 0.0
    %479 = vmatpush1.msra.mxu0 0.0
    %480 = vmatprep.subr.mxu0 0.0
    %481 = vmatpush1.msra.mxu0 0.0
    %482 = vmatprep.subr.mxu0 0.0
    %483 = vmatpush1.msra.mxu0 0.0
    %484 = vmatprep.subr.mxu0 0.0
    %485 = vmatpush1.msra.mxu0 0.0
    %486 = vmatprep.subr.mxu0 0.0
    %487 = vmatpush1.msra.mxu0 0.0
    %488 = vmatprep.subr.mxu0 0.0
    %489 = vmatpush1.msra.mxu0 0.0
    %490 = vmatprep.subr.mxu0 0.0
    %491 = vmatpush1.msra.mxu0 0.0
    %492 = vmatprep.subr.mxu0 0.0
    %493 = vmatpush1.msra.mxu0 0.0
    %494 = vmatprep.subr.mxu0 0.0
    %495 = vmatpush1.msra.mxu0 0.0
    %496 = vmatprep.subr.mxu0 0.0
    %497 = vmatpush1.msra.mxu0 0.0
    %498 = vmatprep.subr.mxu0 0.0
    %499 = vmatpush1.msra.mxu0 0.0
    %500 = vmatprep.subr.mxu0 0.0
    %501 = vmatpush1.msra.mxu0 %v79
    %502 = vmatprep.subr.mxu0 0.0
    %503 = vmatpush1.msra.mxu0 %v78
    %504 = vmatprep.subr.mxu0 0.0
    %505 = vmatpush1.msra.mxu0 %v77
    %506 = vmatprep.subr.mxu0 0.0
    %507 = vmatpush1.msra.mxu0 %v76
    %508 = vmatprep.subr.mxu0 0.0
    %509 = vmatpush2.msra.mxu0 0.0
    %510 = vmatprep.subr.mxu0 0.0
    %511 = vmatpush2.msra.mxu0 0.0
    %512 = vmatprep.subr.mxu0 0.0
    %513 = vmatpush2.msra.mxu0 0.0
    %514 = vmatprep.subr.mxu0 0.0
    %515 = vmatpush2.msra.mxu0 0.0
    %516 = vmatprep.subr.mxu0 0.0
    %517 = vmatpush2.msra.mxu0 0.0
    %518 = vmatprep.subr.mxu0 0.0
    %519 = vmatpush2.msra.mxu0 0.0
    %520 = vmatprep.subr.mxu0 0.0
    %521 = vmatpush2.msra.mxu0 0.0
    %522 = vmatprep.subr.mxu0 0.0
    %523 = vmatpush2.msra.mxu0 0.0
    %524 = vmatprep.subr.mxu0 0.0
    %525 = vmatpush2.msra.mxu0 0.0
    %526 = vmatprep.subr.mxu0 0.0
    %527 = vmatpush2.msra.mxu0 0.0
    %528 = vmatprep.subr.mxu0 0.0
    %529 = vmatpush2.msra.mxu0 0.0
    %530 = vmatprep.subr.mxu0 0.0
    %531 = vmatpush2.msra.mxu0 0.0
    %532 = vmatprep.subr.mxu0 0.0
    %533 = vmatpush2.msra.mxu0 0.0
    %534 = vmatprep.subr.mxu0 0.0
    %535 = vmatpush2.msra.mxu0 0.0
    %536 = vmatprep.subr.mxu0 0.0
    %537 = vmatpush2.msra.mxu0 0.0
    %538 = vmatprep.subr.mxu0 0.0
    %539 = vmatpush2.msra.mxu0 0.0
    %540 = vmatprep.mubr.f32.mxu0 0.0
    %541 = vmatmul.mubr.f32.gmra.mxu0 %v474
    %v542 = vpop.f32.mrf.mxu0
    %v543 = vadd.f32 %v85, %v542
    %v544 = vpop.f32.mrf.mxu0
    %545 = vdwg.mxu0
    %s546 = scalar_lea.vmem [#allocation2], 40
    %547 = vst [vmem:[%s546] sm:$0xff] %v543
    %s548 = scalar_lea.vmem [#allocation3], 48
    %v549 = vld [vmem:[%s548] sm:$0xff]
    %v551 = vsel %vm88, %v549, 0
    %553 = vmatprep.subr.mxu0 0.0
    %554 = vmatpush1.msra.mxu0 0.0
    %555 = vmatprep.subr.mxu0 0.0
    %556 = vmatpush1.msra.mxu0 0.0
    %557 = vmatprep.subr.mxu0 0.0
    %558 = vmatpush1.msra.mxu0 0.0
    %559 = vmatprep.subr.mxu0 0.0
    %560 = vmatpush1.msra.mxu0 0.0
    %561 = vmatprep.subr.mxu0 0.0
    %562 = vmatpush1.msra.mxu0 0.0
    %563 = vmatprep.subr.mxu0 0.0
    %564 = vmatpush1.msra.mxu0 0.0
    %565 = vmatprep.subr.mxu0 0.0
    %566 = vmatpush1.msra.mxu0 0.0
    %567 = vmatprep.subr.mxu0 0.0
    %568 = vmatpush1.msra.mxu0 0.0
    %569 = vmatprep.subr.mxu0 0.0
    %570 = vmatpush1.msra.mxu0 0.0
    %571 = vmatprep.subr.mxu0 0.0
    %572 = vmatpush1.msra.mxu0 0.0
    %573 = vmatprep.subr.mxu0 0.0
    %574 = vmatpush1.msra.mxu0 0.0
    %575 = vmatprep.subr.mxu0 0.0
    %576 = vmatpush1.msra.mxu0 0.0
    %577 = vmatprep.subr.mxu0 0.0
    %578 = vmatpush1.msra.mxu0 %v79
    %579 = vmatprep.subr.mxu0 0.0
    %580 = vmatpush1.msra.mxu0 %v78
    %581 = vmatprep.subr.mxu0 0.0
    %582 = vmatpush1.msra.mxu0 %v77
    %583 = vmatprep.subr.mxu0 0.0
    %584 = vmatpush1.msra.mxu0 %v76
    %585 = vmatprep.subr.mxu0 0.0
    %586 = vmatpush2.msra.mxu0 0.0
    %587 = vmatprep.subr.mxu0 0.0
    %588 = vmatpush2.msra.mxu0 0.0
    %589 = vmatprep.subr.mxu0 0.0
    %590 = vmatpush2.msra.mxu0 0.0
    %591 = vmatprep.subr.mxu0 0.0
    %592 = vmatpush2.msra.mxu0 0.0
    %593 = vmatprep.subr.mxu0 0.0
    %594 = vmatpush2.msra.mxu0 0.0
    %595 = vmatprep.subr.mxu0 0.0
    %596 = vmatpush2.msra.mxu0 0.0
    %597 = vmatprep.subr.mxu0 0.0
    %598 = vmatpush2.msra.mxu0 0.0
    %599 = vmatprep.subr.mxu0 0.0
    %600 = vmatpush2.msra.mxu0 0.0
    %601 = vmatprep.subr.mxu0 0.0
    %602 = vmatpush2.msra.mxu0 0.0
    %603 = vmatprep.subr.mxu0 0.0
    %604 = vmatpush2.msra.mxu0 0.0
    %605 = vmatprep.subr.mxu0 0.0
    %606 = vmatpush2.msra.mxu0 0.0
    %607 = vmatprep.subr.mxu0 0.0
    %608 = vmatpush2.msra.mxu0 0.0
    %609 = vmatprep.subr.mxu0 0.0
    %610 = vmatpush2.msra.mxu0 0.0
    %611 = vmatprep.subr.mxu0 0.0
    %612 = vmatpush2.msra.mxu0 0.0
    %613 = vmatprep.subr.mxu0 0.0
    %614 = vmatpush2.msra.mxu0 0.0
    %615 = vmatprep.subr.mxu0 0.0
    %616 = vmatpush2.msra.mxu0 0.0
    %617 = vmatprep.mubr.f32.mxu0 0.0
    %618 = vmatmul.mubr.f32.gmra.mxu0 %v551
    %v619 = vpop.f32.mrf.mxu0
    %v620 = vadd.f32 %v85, %v619
    %v621 = vpop.f32.mrf.mxu0
    %622 = vdwg.mxu0
    %s623 = scalar_lea.vmem [#allocation2], 48
    %624 = vst [vmem:[%s623] sm:$0xff] %v620
    %s625 = scalar_lea.vmem [#allocation3], 56
    %v626 = vld [vmem:[%s625] sm:$0xff]
    %v628 = vsel %vm88, %v626, 0
    %630 = vmatprep.subr.mxu0 0.0
    %631 = vmatpush1.msra.mxu0 0.0
    %632 = vmatprep.subr.mxu0 0.0
    %633 = vmatpush1.msra.mxu0 0.0
    %634 = vmatprep.subr.mxu0 0.0
    %635 = vmatpush1.msra.mxu0 0.0
    %636 = vmatprep.subr.mxu0 0.0
    %637 = vmatpush1.msra.mxu0 0.0
    %638 = vmatprep.subr.mxu0 0.0
    %639 = vmatpush1.msra.mxu0 0.0
    %640 = vmatprep.subr.mxu0 0.0
    %641 = vmatpush1.msra.mxu0 0.0
    %642 = vmatprep.subr.mxu0 0.0
    %643 = vmatpush1.msra.mxu0 0.0
    %644 = vmatprep.subr.mxu0 0.0
    %645 = vmatpush1.msra.mxu0 0.0
    %646 = vmatprep.subr.mxu0 0.0
    %647 = vmatpush1.msra.mxu0 0.0
    %648 = vmatprep.subr.mxu0 0.0
    %649 = vmatpush1.msra.mxu0 0.0
    %650 = vmatprep.subr.mxu0 0.0
    %651 = vmatpush1.msra.mxu0 0.0
    %652 = vmatprep.subr.mxu0 0.0
    %653 = vmatpush1.msra.mxu0 0.0
    %654 = vmatprep.subr.mxu0 0.0
    %655 = vmatpush1.msra.mxu0 %v79
    %656 = vmatprep.subr.mxu0 0.0
    %657 = vmatpush1.msra.mxu0 %v78
    %658 = vmatprep.subr.mxu0 0.0
    %659 = vmatpush1.msra.mxu0 %v77
    %660 = vmatprep.subr.mxu0 0.0
    %661 = vmatpush1.msra.mxu0 %v76
    %662 = vmatprep.subr.mxu0 0.0
    %663 = vmatpush2.msra.mxu0 0.0
    %664 = vmatprep.subr.mxu0 0.0
    %665 = vmatpush2.msra.mxu0 0.0
    %666 = vmatprep.subr.mxu0 0.0
    %667 = vmatpush2.msra.mxu0 0.0
    %668 = vmatprep.subr.mxu0 0.0
    %669 = vmatpush2.msra.mxu0 0.0
    %670 = vmatprep.subr.mxu0 0.0
    %671 = vmatpush2.msra.mxu0 0.0
    %672 = vmatprep.subr.mxu0 0.0
    %673 = vmatpush2.msra.mxu0 0.0
    %674 = vmatprep.subr.mxu0 0.0
    %675 = vmatpush2.msra.mxu0 0.0
    %676 = vmatprep.subr.mxu0 0.0
    %677 = vmatpush2.msra.mxu0 0.0
    %678 = vmatprep.subr.mxu0 0.0
    %679 = vmatpush2.msra.mxu0 0.0
    %680 = vmatprep.subr.mxu0 0.0
    %681 = vmatpush2.msra.mxu0 0.0
    %682 = vmatprep.subr.mxu0 0.0
    %683 = vmatpush2.msra.mxu0 0.0
    %684 = vmatprep.subr.mxu0 0.0
    %685 = vmatpush2.msra.mxu0 0.0
    %686 = vmatprep.subr.mxu0 0.0
    %687 = vmatpush2.msra.mxu0 0.0
    %688 = vmatprep.subr.mxu0 0.0
    %689 = vmatpush2.msra.mxu0 0.0
    %690 = vmatprep.subr.mxu0 0.0
    %691 = vmatpush2.msra.mxu0 0.0
    %692 = vmatprep.subr.mxu0 0.0
    %693 = vmatpush2.msra.mxu0 0.0
    %694 = vmatprep.mubr.f32.mxu0 0.0
    %695 = vmatmul.mubr.f32.gmra.mxu0 %v628
    %v696 = vpop.f32.mrf.mxu0
    %v697 = vadd.f32 %v85, %v696
    %v698 = vpop.f32.mrf.mxu0
    %699 = vdwg.mxu0
    %s700 = scalar_lea.vmem [#allocation2], 56
    %701 = vst [vmem:[%s700] sm:$0xff] %v697
    %v702 = vld [vmem:[#allocation8] sm:$0xff]
    %v703 = vld [vmem:[#allocation8 + $0x8] sm:$0xff]
    %v704 = vld [vmem:[#allocation8 + $0x10] sm:$0xff]
    %v705 = vld [vmem:[#allocation8 + $0x18] sm:$0xff]
    %v706 = vld [vmem:[#allocation8 + $0x20] sm:$0xff]
    %v707 = vld [vmem:[#allocation8 + $0x28] sm:$0xff]
    %v708 = vld [vmem:[#allocation8 + $0x30] sm:$0xff]
    %v709 = vld [vmem:[#allocation8 + $0x38] sm:$0xff]
    %v710 = vld [vmem:[#allocation8 + $0x40] sm:$0xff]
    %v711 = vld [vmem:[#allocation8 + $0x48] sm:$0xff]
    %v712 = vld [vmem:[#allocation8 + $0x50] sm:$0xff]
    %v713 = vld [vmem:[#allocation8 + $0x58] sm:$0xff]
    %v714 = vld [vmem:[#allocation8 + $0x60] sm:$0xff]
    %v715 = vld [vmem:[#allocation8 + $0x68] sm:$0xff]
    %v716 = vld [vmem:[#allocation8 + $0x70] sm:$0xff]
    %v717 = vld [vmem:[#allocation8 + $0x78] sm:$0xff]
    %v718 = vld [vmem:[#allocation8 + $0x80] sm:$0xff]
    %v719 = vld [vmem:[#allocation8 + $0x88] sm:$0xff]
    %v720 = vld [vmem:[#allocation8 + $0x90] sm:$0xff]
    %v721 = vld [vmem:[#allocation8 + $0x98] sm:$0xff]
    %v722 = vld [vmem:[#allocation8 + $0xa0] sm:$0xff]
    %v723 = vld [vmem:[#allocation8 + $0xa8] sm:$0xff]
    %v724 = vld [vmem:[#allocation8 + $0xb0] sm:$0xff]
    %v725 = vld [vmem:[#allocation8 + $0xb8] sm:$0xff]
    %v726 = vld [vmem:[#allocation8 + $0xc0] sm:$0xff]
    %v727 = vld [vmem:[#allocation8 + $0xc8] sm:$0xff]
    %v728 = vld [vmem:[#allocation8 + $0xd0] sm:$0xff]
    %v729 = vld [vmem:[#allocation8 + $0xd8] sm:$0xff]
    %v730 = vld [vmem:[#allocation8 + $0xe0] sm:$0xff]
    %v731 = vld [vmem:[#allocation8 + $0xe8] sm:$0xff]
    %v732 = vld [vmem:[#allocation8 + $0xf0] sm:$0xff]
    %v733 = vld [vmem:[#allocation8 + $0xf8] sm:$0xff]
    %v734 = vld [vmem:[#allocation8 + $0x100] sm:$0xff]
    %v735 = vld [vmem:[#allocation8 + $0x108] sm:$0xff]
    %v736 = vld [vmem:[#allocation8 + $0x110] sm:$0xff]
    %v737 = vld [vmem:[#allocation8 + $0x118] sm:$0xff]
    %v738 = vld [vmem:[#allocation8 + $0x120] sm:$0xff]
    %v739 = vld [vmem:[#allocation8 + $0x128] sm:$0xff]
    %v740 = vld [vmem:[#allocation8 + $0x130] sm:$0xff]
    %v741 = vld [vmem:[#allocation8 + $0x138] sm:$0xff]
    %v742 = vld [vmem:[#allocation8 + $0x140] sm:$0xff]
    %v743 = vld [vmem:[#allocation8 + $0x148] sm:$0xff]
    %v744 = vld [vmem:[#allocation8 + $0x150] sm:$0xff]
    %v745 = vld [vmem:[#allocation8 + $0x158] sm:$0xff]
    %v746 = vld [vmem:[#allocation8 + $0x160] sm:$0xff]
    %v747 = vld [vmem:[#allocation8 + $0x168] sm:$0xff]
    %v748 = vld [vmem:[#allocation8 + $0x170] sm:$0xff]
    %v749 = vld [vmem:[#allocation8 + $0x178] sm:$0xff]
    %v750 = vld [vmem:[#allocation8 + $0x180] sm:$0xff]
    %v751 = vld [vmem:[#allocation8 + $0x188] sm:$0xff]
    %v752 = vld [vmem:[#allocation8 + $0x190] sm:$0xff]
    %v753 = vld [vmem:[#allocation8 + $0x198] sm:$0xff]
    %v754 = vld [vmem:[#allocation8 + $0x1a0] sm:$0xff]
    %v755 = vld [vmem:[#allocation8 + $0x1a8] sm:$0xff]
    %v756 = vld [vmem:[#allocation8 + $0x1b0] sm:$0xff]
    %v757 = vld [vmem:[#allocation8 + $0x1b8] sm:$0xff]
    %v758 = vld [vmem:[#allocation8 + $0x1c0] sm:$0xff]
    %v759 = vld [vmem:[#allocation8 + $0x1c8] sm:$0xff]
    %v760 = vld [vmem:[#allocation8 + $0x1d0] sm:$0xff]
    %v761 = vld [vmem:[#allocation8 + $0x1d8] sm:$0xff]
    %v762 = vld [vmem:[#allocation8 + $0x1e0] sm:$0xff]
    %v763 = vld [vmem:[#allocation8 + $0x1e8] sm:$0xff]
    %v764 = vld [vmem:[#allocation8 + $0x1f0] sm:$0xff]
    %v765 = vld [vmem:[#allocation8 + $0x1f8] sm:$0xff]
    %v766 = vlaneseq
    %v767 = vand.u32 %v766, 127
    %vm768 = vcmp.ge.s32.totalorder %v767, 96
    %s769 = scalar_lea.vmem %s3, 1
    %v770 = vld [vmem:[%s769] sm:$0x1]
    %v772 = vlaneseq
    %v773 = vshrl.u32 %v772, 7
    %v774 = vsub.s32 0, %v773
    %v775 = vrot.slane %v770, %v774
    %v777 = vld [vmem:[#allocation2] sm:$0xff]
    %v778 = vtanh.pop %v777
    %v779 = vxor.u32 %v777, 2147483648
    %v780 = vmul.f32 %v779, 1.442695
    %v781 = vpow.pop %v780
    %v782 = vadd.f32 %v781, 1.0
    %v783 = vrcp.pop %v782
    %v784 = vmul.f32 1.0, %v783
    %v785 = vsel %vm768, %v778, %v784
    %786 = vrot.lane.b32.xlu0 %v785, 96
    %v787 = vpop.permute.xlu0 %786
    %788 = vrot.lane.b32.xlu0 %v785, 64
    %v789 = vpop.permute.xlu0 %788
    %790 = vrot.lane.b32.xlu0 %v785, 32
    %v791 = vpop.permute.xlu0 %790
    %v792 = vmul.f32 %v787, 0.0
    %v793 = vmul.f32 %v785, %v791
    %v794 = vadd.f32 %v792, %v793
    %v795 = vtanh.pop %v794
    %v796 = vmul.f32 %v789, %v795
    %v797 = vld [vmem:[#allocation9] sm:$0xff]
    %v798 = vmul.f32 %v797, %v794
    %v799 = vadd.f32 %v798, 0.0
    %v800 = vmul.f32 %v797, %v796
    %v801 = vadd.f32 %v800, 0.0
    %802 = vmatprep.subr.mxu0 %v733
    %803 = vmatpush1.msra.mxu0 %v732
    %804 = vmatprep.subr.mxu0 %v731
    %805 = vmatpush1.msra.mxu0 %v730
    %806 = vmatprep.subr.mxu0 %v729
    %807 = vmatpush1.msra.mxu0 %v728
    %808 = vmatprep.subr.mxu0 %v727
    %809 = vmatpush1.msra.mxu0 %v726
    %810 = vmatprep.subr.mxu0 %v725
    %811 = vmatpush1.msra.mxu0 %v724
    %812 = vmatprep.subr.mxu0 %v723
    %813 = vmatpush1.msra.mxu0 %v722
    %814 = vmatprep.subr.mxu0 %v721
    %815 = vmatpush1.msra.mxu0 %v720
    %816 = vmatprep.subr.mxu0 %v719
    %817 = vmatpush1.msra.mxu0 %v718
    %818 = vmatprep.subr.mxu0 %v717
    %819 = vmatpush1.msra.mxu0 %v716
    %820 = vmatprep.subr.mxu0 %v715
    %821 = vmatpush1.msra.mxu0 %v714
    %822 = vmatprep.subr.mxu0 %v713
    %823 = vmatpush1.msra.mxu0 %v712
    %824 = vmatprep.subr.mxu0 %v711
    %825 = vmatpush1.msra.mxu0 %v710
    %826 = vmatprep.subr.mxu0 %v709
    %827 = vmatpush1.msra.mxu0 %v708
    %828 = vmatprep.subr.mxu0 %v707
    %829 = vmatpush1.msra.mxu0 %v706
    %830 = vmatprep.subr.mxu0 %v705
    %831 = vmatpush1.msra.mxu0 %v704
    %832 = vmatprep.subr.mxu0 %v703
    %833 = vmatpush1.msra.mxu0 %v702
    %834 = vmatprep.subr.mxu0 %v765
    %835 = vmatpush2.msra.mxu0 %v764
    %836 = vmatprep.subr.mxu0 %v763
    %837 = vmatpush2.msra.mxu0 %v762
    %838 = vmatprep.subr.mxu0 %v761
    %839 = vmatpush2.msra.mxu0 %v760
    %840 = vmatprep.subr.mxu0 %v759
    %841 = vmatpush2.msra.mxu0 %v758
    %842 = vmatprep.subr.mxu0 %v757
    %843 = vmatpush2.msra.mxu0 %v756
    %844 = vmatprep.subr.mxu0 %v755
    %845 = vmatpush2.msra.mxu0 %v754
    %846 = vmatprep.subr.mxu0 %v753
    %847 = vmatpush2.msra.mxu0 %v752
    %848 = vmatprep.subr.mxu0 %v751
    %849 = vmatpush2.msra.mxu0 %v750
    %850 = vmatprep.subr.mxu0 %v749
    %851 = vmatpush2.msra.mxu0 %v748
    %852 = vmatprep.subr.mxu0 %v747
    %853 = vmatpush2.msra.mxu0 %v746
    %854 = vmatprep.subr.mxu0 %v745
    %855 = vmatpush2.msra.mxu0 %v744
    %856 = vmatprep.subr.mxu0 %v743
    %857 = vmatpush2.msra.mxu0 %v742
    %858 = vmatprep.subr.mxu0 %v741
    %859 = vmatpush2.msra.mxu0 %v740
    %860 = vmatprep.subr.mxu0 %v739
    %861 = vmatpush2.msra.mxu0 %v738
    %862 = vmatprep.subr.mxu0 %v737
    %863 = vmatpush2.msra.mxu0 %v736
    %864 = vmatprep.subr.mxu0 %v735
    %865 = vmatpush2.msra.mxu0 %v734
    %866 = vmatprep.mubr.f32.mxu0 0.0
    %867 = vmatmul.mubr.f32.gmra.mxu0 %v801
    %v868 = vpop.f32.mrf.mxu0
    %v869 = vadd.f32 0.0, %v868
    %v870 = vpop.f32.mrf.mxu0
    %v871 = vadd.f32 0.0, %v870
    %872 = vdwg.mxu0
    %v873 = vld [vmem:[%s238] sm:$0xff]
    %v874 = vadd.f32 %v869, %v873
    %v875 = vtanh.pop %v874
    %v876 = vxor.u32 %v874, 2147483648
    %v877 = vmul.f32 %v876, 1.442695
    %v878 = vpow.pop %v877
    %v879 = vadd.f32 %v878, 1.0
    %v880 = vrcp.pop %v879
    %v881 = vmul.f32 1.0, %v880
    %v882 = vsel %vm768, %v875, %v881
    %883 = vrot.lane.b32.xlu0 %v882, 96
    %v884 = vpop.permute.xlu0 %883
    %885 = vrot.lane.b32.xlu0 %v882, 64
    %v886 = vpop.permute.xlu0 %885
    %887 = vrot.lane.b32.xlu0 %v882, 32
    %v888 = vpop.permute.xlu0 %887
    %v889 = vmul.f32 %v884, %v799
    %v890 = vmul.f32 %v882, %v888
    %v891 = vadd.f32 %v889, %v890
    %v892 = vtanh.pop %v891
    %v893 = vmul.f32 %v886, %v892
    %s894 = scalar_lea.vmem [#allocation9], 8
    %v895 = vld [vmem:[%s894] sm:$0xff]
    %v896 = vsub.f32 %v891, %v799
    %v897 = vmul.f32 %v895, %v896
    %v898 = vadd.f32 %v799, %v897
    %v899 = vsub.f32 %v893, %v801
    %v900 = vmul.f32 %v895, %v899
    %v901 = vadd.f32 %v801, %v900
    %v902 = vadd.f32 %v871, %v775
    %v903 = vtanh.pop %v902
    %v904 = vxor.u32 %v902, 2147483648
    %v905 = vmul.f32 %v904, 1.442695
    %v906 = vpow.pop %v905
    %v907 = vadd.f32 %v906, 1.0
    %v908 = vrcp.pop %v907
    %v909 = vmul.f32 1.0, %v908
    %v910 = vsel %vm768, %v903, %v909
    %911 = vrot.lane.b32.xlu0 %v910, 96
    %v912 = vpop.permute.xlu0 %911
    %913 = vrot.lane.b32.xlu0 %v910, 64
    %v914 = vpop.permute.xlu0 %913
    %915 = vrot.lane.b32.xlu0 %v910, 32
    %v916 = vpop.permute.xlu0 %915
    %v917 = vmul.f32 %v912, 0.0
    %v918 = vmul.f32 %v910, %v916
    %v919 = vadd.f32 %v917, %v918
    %v920 = vtanh.pop %v919
    %v921 = vmul.f32 %v914, %v920
    %v922 = vmul.f32 %v797, %v919
    %v923 = vadd.f32 %v922, 0.0
    %v924 = vmul.f32 %v797, %v921
    %v925 = vadd.f32 %v924, 0.0
    %926 = vmatprep.subr.mxu0 %v733
    %927 = vmatpush1.msra.mxu0 %v732
    %928 = vmatprep.subr.mxu0 %v731
    %929 = vmatpush1.msra.mxu0 %v730
    %930 = vmatprep.subr.mxu0 %v729
    %931 = vmatpush1.msra.mxu0 %v728
    %932 = vmatprep.subr.mxu0 %v727
    %933 = vmatpush1.msra.mxu0 %v726
    %934 = vmatprep.subr.mxu0 %v725
    %935 = vmatpush1.msra.mxu0 %v724
    %936 = vmatprep.subr.mxu0 %v723
    %937 = vmatpush1.msra.mxu0 %v722
    %938 = vmatprep.subr.mxu0 %v721
    %939 = vmatpush1.msra.mxu0 %v720
    %940 = vmatprep.subr.mxu0 %v719
    %941 = vmatpush1.msra.mxu0 %v718
    %942 = vmatprep.subr.mxu0 %v717
    %943 = vmatpush1.msra.mxu0 %v716
    %944 = vmatprep.subr.mxu0 %v715
    %945 = vmatpush1.msra.mxu0 %v714
    %946 = vmatprep.subr.mxu0 %v713
    %947 = vmatpush1.msra.mxu0 %v712
    %948 = vmatprep.subr.mxu0 %v711
    %949 = vmatpush1.msra.mxu0 %v710
    %950 = vmatprep.subr.mxu0 %v709
    %951 = vmatpush1.msra.mxu0 %v708
    %952 = vmatprep.subr.mxu0 %v707
    %953 = vmatpush1.msra.mxu0 %v706
    %954 = vmatprep.subr.mxu0 %v705
    %955 = vmatpush1.msra.mxu0 %v704
    %956 = vmatprep.subr.mxu0 %v703
    %957 = vmatpush1.msra.mxu0 %v702
    %958 = vmatprep.subr.mxu0 %v765
    %959 = vmatpush2.msra.mxu0 %v764
    %960 = vmatprep.subr.mxu0 %v763
    %961 = vmatpush2.msra.mxu0 %v762
    %962 = vmatprep.subr.mxu0 %v761
    %963 = vmatpush2.msra.mxu0 %v760
    %964 = vmatprep.subr.mxu0 %v759
    %965 = vmatpush2.msra.mxu0 %v758
    %966 = vmatprep.subr.mxu0 %v757
    %967 = vmatpush2.msra.mxu0 %v756
    %968 = vmatprep.subr.mxu0 %v755
    %969 = vmatpush2.msra.mxu0 %v754
    %970 = vmatprep.subr.mxu0 %v753
    %971 = vmatpush2.msra.mxu0 %v752
    %972 = vmatprep.subr.mxu0 %v751
    %973 = vmatpush2.msra.mxu0 %v750
    %974 = vmatprep.subr.mxu0 %v749
    %975 = vmatpush2.msra.mxu0 %v748
    %976 = vmatprep.subr.mxu0 %v747
    %977 = vmatpush2.msra.mxu0 %v746
    %978 = vmatprep.subr.mxu0 %v745
    %979 = vmatpush2.msra.mxu0 %v744
    %980 = vmatprep.subr.mxu0 %v743
    %981 = vmatpush2.msra.mxu0 %v742
    %982 = vmatprep.subr.mxu0 %v741
    %983 = vmatpush2.msra.mxu0 %v740
    %984 = vmatprep.subr.mxu0 %v739
    %985 = vmatpush2.msra.mxu0 %v738
    %986 = vmatprep.subr.mxu0 %v737
    %987 = vmatpush2.msra.mxu0 %v736
    %988 = vmatprep.subr.mxu0 %v735
    %989 = vmatpush2.msra.mxu0 %v734
    %990 = vmatprep.mubr.f32.mxu0 %v925
    %991 = vmatmul.mubr.f32.gmra.mxu0 %v901
    %v992 = vpop.f32.mrf.mxu0
    %v993 = vadd.f32 0.0, %v992
    %v994 = vpop.f32.mrf.mxu0
    %v995 = vadd.f32 0.0, %v994
    %996 = vdwg.mxu0
    %v997 = vld [vmem:[%s315] sm:$0xff]
    %v998 = vadd.f32 %v993, %v997
    %v999 = vtanh.pop %v998
    %v1000 = vxor.u32 %v998, 2147483648
    %v1001 = vmul.f32 %v1000, 1.442695
    %v1002 = vpow.pop %v1001
    %v1003 = vadd.f32 %v1002, 1.0
    %v1004 = vrcp.pop %v1003
    %v1005 = vmul.f32 1.0, %v1004
    %v1006 = vsel %vm768, %v999, %v1005
    %1007 = vrot.lane.b32.xlu0 %v1006, 96
    %v1008 = vpop.permute.xlu0 %1007
    %1009 = vrot.lane.b32.xlu0 %v1006, 64
    %v1010 = vpop.permute.xlu0 %1009
    %1011 = vrot.lane.b32.xlu0 %v1006, 32
    %v1012 = vpop.permute.xlu0 %1011
    %v1013 = vmul.f32 %v1008, %v898
    %v1014 = vmul.f32 %v1006, %v1012
    %v1015 = vadd.f32 %v1013, %v1014
    %v1016 = vtanh.pop %v1015
    %v1017 = vmul.f32 %v1010, %v1016
    %s1018 = scalar_lea.vmem [#allocation9], 16
    %v1019 = vld [vmem:[%s1018] sm:$0xff]
    %v1020 = vsub.f32 %v1015, %v898
    %v1021 = vmul.f32 %v1019, %v1020
    %v1022 = vadd.f32 %v898, %v1021
    %v1023 = vsub.f32 %v1017, %v901
    %v1024 = vmul.f32 %v1019, %v1023
    %v1025 = vadd.f32 %v901, %v1024
    %v1026 = vadd.f32 %v995, %v775
    %v1027 = vtanh.pop %v1026
    %v1028 = vxor.u32 %v1026, 2147483648
    %v1029 = vmul.f32 %v1028, 1.442695
    %v1030 = vpow.pop %v1029
    %v1031 = vadd.f32 %v1030, 1.0
    %v1032 = vrcp.pop %v1031
    %v1033 = vmul.f32 1.0, %v1032
    %v1034 = vsel %vm768, %v1027, %v1033
    %1035 = vrot.lane.b32.xlu0 %v1034, 96
    %v1036 = vpop.permute.xlu0 %1035
    %1037 = vrot.lane.b32.xlu0 %v1034, 64
    %v1038 = vpop.permute.xlu0 %1037
    %1039 = vrot.lane.b32.xlu0 %v1034, 32
    %v1040 = vpop.permute.xlu0 %1039
    %v1041 = vmul.f32 %v1036, %v923
    %v1042 = vmul.f32 %v1034, %v1040
    %v1043 = vadd.f32 %v1041, %v1042
    %v1044 = vtanh.pop %v1043
    %v1045 = vmul.f32 %v1038, %v1044
    %v1046 = vsub.f32 %v1043, %v923
    %v1047 = vmul.f32 %v895, %v1046
    %v1048 = vadd.f32 %v923, %v1047
    %v1049 = vsub.f32 %v1045, %v925
    %v1050 = vmul.f32 %v895, %v1049
    %v1051 = vadd.f32 %v925, %v1050
    %1052 = vmatprep.subr.mxu0 %v733
    %1053 = vmatpush1.msra.mxu0 %v732
    %1054 = vmatprep.subr.mxu0 %v731
    %1055 = vmatpush1.msra.mxu0 %v730
    %1056 = vmatprep.subr.mxu0 %v729
    %1057 = vmatpush1.msra.mxu0 %v728
    %1058 = vmatprep.subr.mxu0 %v727
    %1059 = vmatpush1.msra.mxu0 %v726
    %1060 = vmatprep.subr.mxu0 %v725
    %1061 = vmatpush1.msra.mxu0 %v724
    %1062 = vmatprep.subr.mxu0 %v723
    %1063 = vmatpush1.msra.mxu0 %v722
    %1064 = vmatprep.subr.mxu0 %v721
    %1065 = vmatpush1.msra.mxu0 %v720
    %1066 = vmatprep.subr.mxu0 %v719
    %1067 = vmatpush1.msra.mxu0 %v718
    %1068 = vmatprep.subr.mxu0 %v717
    %1069 = vmatpush1.msra.mxu0 %v716
    %1070 = vmatprep.subr.mxu0 %v715
    %1071 = vmatpush1.msra.mxu0 %v714
    %1072 = vmatprep.subr.mxu0 %v713
    %1073 = vmatpush1.msra.mxu0 %v712
    %1074 = vmatprep.subr.mxu0 %v711
    %1075 = vmatpush1.msra.mxu0 %v710
    %1076 = vmatprep.subr.mxu0 %v709
    %1077 = vmatpush1.msra.mxu0 %v708
    %1078 = vmatprep.subr.mxu0 %v707
    %1079 = vmatpush1.msra.mxu0 %v706
    %1080 = vmatprep.subr.mxu0 %v705
    %1081 = vmatpush1.msra.mxu0 %v704
    %1082 = vmatprep.subr.mxu0 %v703
    %1083 = vmatpush1.msra.mxu0 %v702
    %1084 = vmatprep.subr.mxu0 %v765
    %1085 = vmatpush2.msra.mxu0 %v764
    %1086 = vmatprep.subr.mxu0 %v763
    %1087 = vmatpush2.msra.mxu0 %v762
    %1088 = vmatprep.subr.mxu0 %v761
    %1089 = vmatpush2.msra.mxu0 %v760
    %1090 = vmatprep.subr.mxu0 %v759
    %1091 = vmatpush2.msra.mxu0 %v758
    %1092 = vmatprep.subr.mxu0 %v757
    %1093 = vmatpush2.msra.mxu0 %v756
    %1094 = vmatprep.subr.mxu0 %v755
    %1095 = vmatpush2.msra.mxu0 %v754
    %1096 = vmatprep.subr.mxu0 %v753
    %1097 = vmatpush2.msra.mxu0 %v752
    %1098 = vmatprep.subr.mxu0 %v751
    %1099 = vmatpush2.msra.mxu0 %v750
    %1100 = vmatprep.subr.mxu0 %v749
    %1101 = vmatpush2.msra.mxu0 %v748
    %1102 = vmatprep.subr.mxu0 %v747
    %1103 = vmatpush2.msra.mxu0 %v746
    %1104 = vmatprep.subr.mxu0 %v745
    %1105 = vmatpush2.msra.mxu0 %v744
    %1106 = vmatprep.subr.mxu0 %v743
    %1107 = vmatpush2.msra.mxu0 %v742
    %1108 = vmatprep.subr.mxu0 %v741
    %1109 = vmatpush2.msra.mxu0 %v740
    %1110 = vmatprep.subr.mxu0 %v739
    %1111 = vmatpush2.msra.mxu0 %v738
    %1112 = vmatprep.subr.mxu0 %v737
    %1113 = vmatpush2.msra.mxu0 %v736
    %1114 = vmatprep.subr.mxu0 %v735
    %1115 = vmatpush2.msra.mxu0 %v734
    %1116 = vmatprep.mubr.f32.mxu0 %v1051
    %1117 = vmatmul.mubr.f32.gmra.mxu0 %v1025
    %v1118 = vpop.f32.mrf.mxu0
    %v1119 = vadd.f32 0.0, %v1118
    %v1120 = vpop.f32.mrf.mxu0
    %v1121 = vadd.f32 0.0, %v1120
    %1122 = vdwg.mxu0
    %v1123 = vld [vmem:[%s392] sm:$0xff]
    %v1124 = vadd.f32 %v1119, %v1123
    %v1125 = vtanh.pop %v1124
    %v1126 = vxor.u32 %v1124, 2147483648
    %v1127 = vmul.f32 %v1126, 1.442695
    %v1128 = vpow.pop %v1127
    %v1129 = vadd.f32 %v1128, 1.0
    %v1130 = vrcp.pop %v1129
    %v1131 = vmul.f32 1.0, %v1130
    %v1132 = vsel %vm768, %v1125, %v1131
    %1133 = vrot.lane.b32.xlu0 %v1132, 96
    %v1134 = vpop.permute.xlu0 %1133
    %1135 = vrot.lane.b32.xlu0 %v1132, 64
    %v1136 = vpop.permute.xlu0 %1135
    %1137 = vrot.lane.b32.xlu0 %v1132, 32
    %v1138 = vpop.permute.xlu0 %1137
    %v1139 = vmul.f32 %v1134, %v1022
    %v1140 = vmul.f32 %v1132, %v1138
    %v1141 = vadd.f32 %v1139, %v1140
    %v1142 = vtanh.pop %v1141
    %v1143 = vmul.f32 %v1136, %v1142
    %s1144 = scalar_lea.vmem [#allocation9], 24
    %v1145 = vld [vmem:[%s1144] sm:$0xff]
    %v1146 = vsub.f32 %v1141, %v1022
    %v1147 = vmul.f32 %v1145, %v1146
    %v1148 = vadd.f32 %v1022, %v1147
    %v1149 = vsub.f32 %v1143, %v1025
    %v1150 = vmul.f32 %v1145, %v1149
    %v1151 = vadd.f32 %v1025, %v1150
    %v1152 = vadd.f32 %v1121, %v775
    %v1153 = vtanh.pop %v1152
    %v1154 = vxor.u32 %v1152, 2147483648
    %v1155 = vmul.f32 %v1154, 1.442695
    %v1156 = vpow.pop %v1155
    %v1157 = vadd.f32 %v1156, 1.0
    %v1158 = vrcp.pop %v1157
    %v1159 = vmul.f32 1.0, %v1158
    %v1160 = vsel %vm768, %v1153, %v1159
    %1161 = vrot.lane.b32.xlu0 %v1160, 96
    %v1162 = vpop.permute.xlu0 %1161
    %1163 = vrot.lane.b32.xlu0 %v1160, 64
    %v1164 = vpop.permute.xlu0 %1163
    %1165 = vrot.lane.b32.xlu0 %v1160, 32
    %v1166 = vpop.permute.xlu0 %1165
    %v1167 = vmul.f32 %v1162, %v1048
    %v1168 = vmul.f32 %v1160, %v1166
    %v1169 = vadd.f32 %v1167, %v1168
    %v1170 = vtanh.pop %v1169
    %v1171 = vmul.f32 %v1164, %v1170
    %v1172 = vsub.f32 %v1169, %v1048
    %v1173 = vmul.f32 %v1019, %v1172
    %v1174 = vadd.f32 %v1048, %v1173
    %v1175 = vsub.f32 %v1171, %v1051
    %v1176 = vmul.f32 %v1019, %v1175
    %v1177 = vadd.f32 %v1051, %v1176
    %1178 = vmatprep.subr.mxu0 %v733
    %1179 = vmatpush1.msra.mxu0 %v732
    %1180 = vmatprep.subr.mxu0 %v731
    %1181 = vmatpush1.msra.mxu0 %v730
    %1182 = vmatprep.subr.mxu0 %v729
    %1183 = vmatpush1.msra.mxu0 %v728
    %1184 = vmatprep.subr.mxu0 %v727
    %1185 = vmatpush1.msra.mxu0 %v726
    %1186 = vmatprep.subr.mxu0 %v725
    %1187 = vmatpush1.msra.mxu0 %v724
    %1188 = vmatprep.subr.mxu0 %v723
    %1189 = vmatpush1.msra.mxu0 %v722
    %1190 = vmatprep.subr.mxu0 %v721
    %1191 = vmatpush1.msra.mxu0 %v720
    %1192 = vmatprep.subr.mxu0 %v719
    %1193 = vmatpush1.msra.mxu0 %v718
    %1194 = vmatprep.subr.mxu0 %v717
    %1195 = vmatpush1.msra.mxu0 %v716
    %1196 = vmatprep.subr.mxu0 %v715
    %1197 = vmatpush1.msra.mxu0 %v714
    %1198 = vmatprep.subr.mxu0 %v713
    %1199 = vmatpush1.msra.mxu0 %v712
    %1200 = vmatprep.subr.mxu0 %v711
    %1201 = vmatpush1.msra.mxu0 %v710
    %1202 = vmatprep.subr.mxu0 %v709
    %1203 = vmatpush1.msra.mxu0 %v708
    %1204 = vmatprep.subr.mxu0 %v707
    %1205 = vmatpush1.msra.mxu0 %v706
    %1206 = vmatprep.subr.mxu0 %v705
    %1207 = vmatpush1.msra.mxu0 %v704
    %1208 = vmatprep.subr.mxu0 %v703
    %1209 = vmatpush1.msra.mxu0 %v702
    %1210 = vmatprep.subr.mxu0 %v765
    %1211 = vmatpush2.msra.mxu0 %v764
    %1212 = vmatprep.subr.mxu0 %v763
    %1213 = vmatpush2.msra.mxu0 %v762
    %1214 = vmatprep.subr.mxu0 %v761
    %1215 = vmatpush2.msra.mxu0 %v760
    %1216 = vmatprep.subr.mxu0 %v759
    %1217 = vmatpush2.msra.mxu0 %v758
    %1218 = vmatprep.subr.mxu0 %v757
    %1219 = vmatpush2.msra.mxu0 %v756
    %1220 = vmatprep.subr.mxu0 %v755
    %1221 = vmatpush2.msra.mxu0 %v754
    %1222 = vmatprep.subr.mxu0 %v753
    %1223 = vmatpush2.msra.mxu0 %v752
    %1224 = vmatprep.subr.mxu0 %v751
    %1225 = vmatpush2.msra.mxu0 %v750
    %1226 = vmatprep.subr.mxu0 %v749
    %1227 = vmatpush2.msra.mxu0 %v748
    %1228 = vmatprep.subr.mxu0 %v747
    %1229 = vmatpush2.msra.mxu0 %v746
    %1230 = vmatprep.subr.mxu0 %v745
    %1231 = vmatpush2.msra.mxu0 %v744
    %1232 = vmatprep.subr.mxu0 %v743
    %1233 = vmatpush2.msra.mxu0 %v742
    %1234 = vmatprep.subr.mxu0 %v741
    %1235 = vmatpush2.msra.mxu0 %v740
    %1236 = vmatprep.subr.mxu0 %v739
    %1237 = vmatpush2.msra.mxu0 %v738
    %1238 = vmatprep.subr.mxu0 %v737
    %1239 = vmatpush2.msra.mxu0 %v736
    %1240 = vmatprep.subr.mxu0 %v735
    %1241 = vmatpush2.msra.mxu0 %v734
    %1242 = vmatprep.mubr.f32.mxu0 %v1177
    %1243 = vmatmul.mubr.f32.gmra.mxu0 %v1151
    %v1244 = vpop.f32.mrf.mxu0
    %v1245 = vadd.f32 0.0, %v1244
    %v1246 = vpop.f32.mrf.mxu0
    %v1247 = vadd.f32 0.0, %v1246
    %1248 = vdwg.mxu0
    %v1249 = vld [vmem:[%s469] sm:$0xff]
    %v1250 = vadd.f32 %v1245, %v1249
    %v1251 = vtanh.pop %v1250
    %v1252 = vxor.u32 %v1250, 2147483648
    %v1253 = vmul.f32 %v1252, 1.442695
    %v1254 = vpow.pop %v1253
    %v1255 = vadd.f32 %v1254, 1.0
    %v1256 = vrcp.pop %v1255
    %v1257 = vmul.f32 1.0, %v1256
    %v1258 = vsel %vm768, %v1251, %v1257
    %1259 = vrot.lane.b32.xlu0 %v1258, 96
    %v1260 = vpop.permute.xlu0 %1259
    %1261 = vrot.lane.b32.xlu0 %v1258, 64
    %v1262 = vpop.permute.xlu0 %1261
    %1263 = vrot.lane.b32.xlu0 %v1258, 32
    %v1264 = vpop.permute.xlu0 %1263
    %v1265 = vmul.f32 %v1260, %v1148
    %v1266 = vmul.f32 %v1258, %v1264
    %v1267 = vadd.f32 %v1265, %v1266
    %v1268 = vtanh.pop %v1267
    %v1269 = vmul.f32 %v1262, %v1268
    %s1270 = scalar_lea.vmem [#allocation9], 32
    %v1271 = vld [vmem:[%s1270] sm:$0xff]
    %v1272 = vsub.f32 %v1267, %v1148
    %v1273 = vmul.f32 %v1271, %v1272
    %v1274 = vadd.f32 %v1148, %v1273
    %v1275 = vsub.f32 %v1269, %v1151
    %v1276 = vmul.f32 %v1271, %v1275
    %v1277 = vadd.f32 %v1151, %v1276
    %v1278 = vadd.f32 %v1247, %v775
    %v1279 = vtanh.pop %v1278
    %v1280 = vxor.u32 %v1278, 2147483648
    %v1281 = vmul.f32 %v1280, 1.442695
    %v1282 = vpow.pop %v1281
    %v1283 = vadd.f32 %v1282, 1.0
    %v1284 = vrcp.pop %v1283
    %v1285 = vmul.f32 1.0, %v1284
    %v1286 = vsel %vm768, %v1279, %v1285
    %1287 = vrot.lane.b32.xlu0 %v1286, 96
    %v1288 = vpop.permute.xlu0 %1287
    %1289 = vrot.lane.b32.xlu0 %v1286, 64
    %v1290 = vpop.permute.xlu0 %1289
    %1291 = vrot.lane.b32.xlu0 %v1286, 32
    %v1292 = vpop.permute.xlu0 %1291
    %v1293 = vmul.f32 %v1288, %v1174
    %v1294 = vmul.f32 %v1286, %v1292
    %v1295 = vadd.f32 %v1293, %v1294
    %v1296 = vtanh.pop %v1295
    %v1297 = vmul.f32 %v1290, %v1296
    %v1298 = vsub.f32 %v1295, %v1174
    %v1299 = vmul.f32 %v1145, %v1298
    %v1300 = vadd.f32 %v1174, %v1299
    %v1301 = vsub.f32 %v1297, %v1177
    %v1302 = vmul.f32 %v1145, %v1301
    %v1303 = vadd.f32 %v1177, %v1302
    %1304 = vmatprep.subr.mxu0 %v733
    %1305 = vmatpush1.msra.mxu0 %v732
    %1306 = vmatprep.subr.mxu0 %v731
    %1307 = vmatpush1.msra.mxu0 %v730
    %1308 = vmatprep.subr.mxu0 %v729
    %1309 = vmatpush1.msra.mxu0 %v728
    %1310 = vmatprep.subr.mxu0 %v727
    %1311 = vmatpush1.msra.mxu0 %v726
    %1312 = vmatprep.subr.mxu0 %v725
    %1313 = vmatpush1.msra.mxu0 %v724
    %1314 = vmatprep.subr.mxu0 %v723
    %1315 = vmatpush1.msra.mxu0 %v722
    %1316 = vmatprep.subr.mxu0 %v721
    %1317 = vmatpush1.msra.mxu0 %v720
    %1318 = vmatprep.subr.mxu0 %v719
    %1319 = vmatpush1.msra.mxu0 %v718
    %1320 = vmatprep.subr.mxu0 %v717
    %1321 = vmatpush1.msra.mxu0 %v716
    %1322 = vmatprep.subr.mxu0 %v715
    %1323 = vmatpush1.msra.mxu0 %v714
    %1324 = vmatprep.subr.mxu0 %v713
    %1325 = vmatpush1.msra.mxu0 %v712
    %1326 = vmatprep.subr.mxu0 %v711
    %1327 = vmatpush1.msra.mxu0 %v710
    %1328 = vmatprep.subr.mxu0 %v709
    %1329 = vmatpush1.msra.mxu0 %v708
    %1330 = vmatprep.subr.mxu0 %v707
    %1331 = vmatpush1.msra.mxu0 %v706
    %1332 = vmatprep.subr.mxu0 %v705
    %1333 = vmatpush1.msra.mxu0 %v704
    %1334 = vmatprep.subr.mxu0 %v703
    %1335 = vmatpush1.msra.mxu0 %v702
    %1336 = vmatprep.subr.mxu0 %v765
    %1337 = vmatpush2.msra.mxu0 %v764
    %1338 = vmatprep.subr.mxu0 %v763
    %1339 = vmatpush2.msra.mxu0 %v762
    %1340 = vmatprep.subr.mxu0 %v761
    %1341 = vmatpush2.msra.mxu0 %v760
    %1342 = vmatprep.subr.mxu0 %v759
    %1343 = vmatpush2.msra.mxu0 %v758
    %1344 = vmatprep.subr.mxu0 %v757
    %1345 = vmatpush2.msra.mxu0 %v756
    %1346 = vmatprep.subr.mxu0 %v755
    %1347 = vmatpush2.msra.mxu0 %v754
    %1348 = vmatprep.subr.mxu0 %v753
    %1349 = vmatpush2.msra.mxu0 %v752
    %1350 = vmatprep.subr.mxu0 %v751
    %1351 = vmatpush2.msra.mxu0 %v750
    %1352 = vmatprep.subr.mxu0 %v749
    %1353 = vmatpush2.msra.mxu0 %v748
    %1354 = vmatprep.subr.mxu0 %v747
    %1355 = vmatpush2.msra.mxu0 %v746
    %1356 = vmatprep.subr.mxu0 %v745
    %1357 = vmatpush2.msra.mxu0 %v744
    %1358 = vmatprep.subr.mxu0 %v743
    %1359 = vmatpush2.msra.mxu0 %v742
    %1360 = vmatprep.subr.mxu0 %v741
    %1361 = vmatpush2.msra.mxu0 %v740
    %1362 = vmatprep.subr.mxu0 %v739
    %1363 = vmatpush2.msra.mxu0 %v738
    %1364 = vmatprep.subr.mxu0 %v737
    %1365 = vmatpush2.msra.mxu0 %v736
    %1366 = vmatprep.subr.mxu0 %v735
    %1367 = vmatpush2.msra.mxu0 %v734
    %1368 = vmatprep.mubr.f32.mxu0 %v1303
    %1369 = vmatmul.mubr.f32.gmra.mxu0 %v1277
    %v1370 = vpop.f32.mrf.mxu0
    %v1371 = vadd.f32 0.0, %v1370
    %v1372 = vpop.f32.mrf.mxu0
    %v1373 = vadd.f32 0.0, %v1372
    %1374 = vdwg.mxu0
    %v1375 = vld [vmem:[%s546] sm:$0xff]
    %v1376 = vadd.f32 %v1371, %v1375
    %v1377 = vtanh.pop %v1376
    %v1378 = vxor.u32 %v1376, 2147483648
    %v1379 = vmul.f32 %v1378, 1.442695
    %v1380 = vpow.pop %v1379
    %v1381 = vadd.f32 %v1380, 1.0
    %v1382 = vrcp.pop %v1381
    %v1383 = vmul.f32 1.0, %v1382
    %v1384 = vsel %vm768, %v1377, %v1383
    %1385 = vrot.lane.b32.xlu0 %v1384, 96
    %v1386 = vpop.permute.xlu0 %1385
    %1387 = vrot.lane.b32.xlu0 %v1384, 64
    %v1388 = vpop.permute.xlu0 %1387
    %1389 = vrot.lane.b32.xlu0 %v1384, 32
    %v1390 = vpop.permute.xlu0 %1389
    %v1391 = vmul.f32 %v1386, %v1274
    %v1392 = vmul.f32 %v1384, %v1390
    %v1393 = vadd.f32 %v1391, %v1392
    %v1394 = vtanh.pop %v1393
    %v1395 = vmul.f32 %v1388, %v1394
    %s1396 = scalar_lea.vmem [#allocation9], 40
    %v1397 = vld [vmem:[%s1396] sm:$0xff]
    %v1398 = vsub.f32 %v1393, %v1274
    %v1399 = vmul.f32 %v1397, %v1398
    %v1400 = vadd.f32 %v1274, %v1399
    %v1401 = vsub.f32 %v1395, %v1277
    %v1402 = vmul.f32 %v1397, %v1401
    %v1403 = vadd.f32 %v1277, %v1402
    %v1404 = vadd.f32 %v1373, %v775
    %v1405 = vtanh.pop %v1404
    %v1406 = vxor.u32 %v1404, 2147483648
    %v1407 = vmul.f32 %v1406, 1.442695
    %v1408 = vpow.pop %v1407
    %v1409 = vadd.f32 %v1408, 1.0
    %v1410 = vrcp.pop %v1409
    %v1411 = vmul.f32 1.0, %v1410
    %v1412 = vsel %vm768, %v1405, %v1411
    %1413 = vrot.lane.b32.xlu0 %v1412, 96
    %v1414 = vpop.permute.xlu0 %1413
    %1415 = vrot.lane.b32.xlu0 %v1412, 64
    %v1416 = vpop.permute.xlu0 %1415
    %1417 = vrot.lane.b32.xlu0 %v1412, 32
    %v1418 = vpop.permute.xlu0 %1417
    %v1419 = vmul.f32 %v1414, %v1300
    %v1420 = vmul.f32 %v1412, %v1418
    %v1421 = vadd.f32 %v1419, %v1420
    %v1422 = vtanh.pop %v1421
    %v1423 = vmul.f32 %v1416, %v1422
    %v1424 = vsub.f32 %v1421, %v1300
    %v1425 = vmul.f32 %v1271, %v1424
    %v1426 = vadd.f32 %v1300, %v1425
    %v1427 = vsub.f32 %v1423, %v1303
    %v1428 = vmul.f32 %v1271, %v1427
    %v1429 = vadd.f32 %v1303, %v1428
    %1430 = vmatprep.subr.mxu0 %v733
    %1431 = vmatpush1.msra.mxu0 %v732
    %1432 = vmatprep.subr.mxu0 %v731
    %1433 = vmatpush1.msra.mxu0 %v730
    %1434 = vmatprep.subr.mxu0 %v729
    %1435 = vmatpush1.msra.mxu0 %v728
    %1436 = vmatprep.subr.mxu0 %v727
    %1437 = vmatpush1.msra.mxu0 %v726
    %1438 = vmatprep.subr.mxu0 %v725
    %1439 = vmatpush1.msra.mxu0 %v724
    %1440 = vmatprep.subr.mxu0 %v723
    %1441 = vmatpush1.msra.mxu0 %v722
    %1442 = vmatprep.subr.mxu0 %v721
    %1443 = vmatpush1.msra.mxu0 %v720
    %1444 = vmatprep.subr.mxu0 %v719
    %1445 = vmatpush1.msra.mxu0 %v718
    %1446 = vmatprep.subr.mxu0 %v717
    %1447 = vmatpush1.msra.mxu0 %v716
    %1448 = vmatprep.subr.mxu0 %v715
    %1449 = vmatpush1.msra.mxu0 %v714
    %1450 = vmatprep.subr.mxu0 %v713
    %1451 = vmatpush1.msra.mxu0 %v712
    %1452 = vmatprep.subr.mxu0 %v711
    %1453 = vmatpush1.msra.mxu0 %v710
    %1454 = vmatprep.subr.mxu0 %v709
    %1455 = vmatpush1.msra.mxu0 %v708
    %1456 = vmatprep.subr.mxu0 %v707
    %1457 = vmatpush1.msra.mxu0 %v706
    %1458 = vmatprep.subr.mxu0 %v705
    %1459 = vmatpush1.msra.mxu0 %v704
    %1460 = vmatprep.subr.mxu0 %v703
    %1461 = vmatpush1.msra.mxu0 %v702
    %1462 = vmatprep.subr.mxu0 %v765
    %1463 = vmatpush2.msra.mxu0 %v764
    %1464 = vmatprep.subr.mxu0 %v763
    %1465 = vmatpush2.msra.mxu0 %v762
    %1466 = vmatprep.subr.mxu0 %v761
    %1467 = vmatpush2.msra.mxu0 %v760
    %1468 = vmatprep.subr.mxu0 %v759
    %1469 = vmatpush2.msra.mxu0 %v758
    %1470 = vmatprep.subr.mxu0 %v757
    %1471 = vmatpush2.msra.mxu0 %v756
    %1472 = vmatprep.subr.mxu0 %v755
    %1473 = vmatpush2.msra.mxu0 %v754
    %1474 = vmatprep.subr.mxu0 %v753
    %1475 = vmatpush2.msra.mxu0 %v752
    %1476 = vmatprep.subr.mxu0 %v751
    %1477 = vmatpush2.msra.mxu0 %v750
    %1478 = vmatprep.subr.mxu0 %v749
    %1479 = vmatpush2.msra.mxu0 %v748
    %1480 = vmatprep.subr.mxu0 %v747
    %1481 = vmatpush2.msra.mxu0 %v746
    %1482 = vmatprep.subr.mxu0 %v745
    %1483 = vmatpush2.msra.mxu0 %v744
    %1484 = vmatprep.subr.mxu0 %v743
    %1485 = vmatpush2.msra.mxu0 %v742
    %1486 = vmatprep.subr.mxu0 %v741
    %1487 = vmatpush2.msra.mxu0 %v740
    %1488 = vmatprep.subr.mxu0 %v739
    %1489 = vmatpush2.msra.mxu0 %v738
    %1490 = vmatprep.subr.mxu0 %v737
    %1491 = vmatpush2.msra.mxu0 %v736
    %1492 = vmatprep.subr.mxu0 %v735
    %1493 = vmatpush2.msra.mxu0 %v734
    %1494 = vmatprep.mubr.f32.mxu0 %v1429
    %1495 = vmatmul.mubr.f32.gmra.mxu0 %v1403
    %v1496 = vpop.f32.mrf.mxu0
    %v1497 = vadd.f32 0.0, %v1496
    %v1498 = vpop.f32.mrf.mxu0
    %v1499 = vadd.f32 0.0, %v1498
    %1500 = vdwg.mxu0
    %v1501 = vld [vmem:[%s623] sm:$0xff]
    %v1502 = vadd.f32 %v1497, %v1501
    %v1503 = vtanh.pop %v1502
    %v1504 = vxor.u32 %v1502, 2147483648
    %v1505 = vmul.f32 %v1504, 1.442695
    %v1506 = vpow.pop %v1505
    %v1507 = vadd.f32 %v1506, 1.0
    %v1508 = vrcp.pop %v1507
    %v1509 = vmul.f32 1.0, %v1508
    %v1510 = vsel %vm768, %v1503, %v1509
    %1511 = vrot.lane.b32.xlu0 %v1510, 96
    %v1512 = vpop.permute.xlu0 %1511
    %1513 = vrot.lane.b32.xlu0 %v1510, 64
    %v1514 = vpop.permute.xlu0 %1513
    %1515 = vrot.lane.b32.xlu0 %v1510, 32
    %v1516 = vpop.permute.xlu0 %1515
    %v1517 = vmul.f32 %v1512, %v1400
    %v1518 = vmul.f32 %v1510, %v1516
    %v1519 = vadd.f32 %v1517, %v1518
    %v1520 = vtanh.pop %v1519
    %v1521 = vmul.f32 %v1514, %v1520
    %s1522 = scalar_lea.vmem [#allocation9], 48
    %v1523 = vld [vmem:[%s1522] sm:$0xff]
    %v1524 = vsub.f32 %v1519, %v1400
    %v1525 = vmul.f32 %v1523, %v1524
    %v1526 = vadd.f32 %v1400, %v1525
    %v1527 = vsub.f32 %v1521, %v1403
    %v1528 = vmul.f32 %v1523, %v1527
    %v1529 = vadd.f32 %v1403, %v1528
    %v1530 = vadd.f32 %v1499, %v775
    %v1531 = vtanh.pop %v1530
    %v1532 = vxor.u32 %v1530, 2147483648
    %v1533 = vmul.f32 %v1532, 1.442695
    %v1534 = vpow.pop %v1533
    %v1535 = vadd.f32 %v1534, 1.0
    %v1536 = vrcp.pop %v1535
    %v1537 = vmul.f32 1.0, %v1536
    %v1538 = vsel %vm768, %v1531, %v1537
    %1539 = vrot.lane.b32.xlu0 %v1538, 96
    %v1540 = vpop.permute.xlu0 %1539
    %1541 = vrot.lane.b32.xlu0 %v1538, 64
    %v1542 = vpop.permute.xlu0 %1541
    %1543 = vrot.lane.b32.xlu0 %v1538, 32
    %v1544 = vpop.permute.xlu0 %1543
    %v1545 = vmul.f32 %v1540, %v1426
    %v1546 = vmul.f32 %v1538, %v1544
    %v1547 = vadd.f32 %v1545, %v1546
    %v1548 = vtanh.pop %v1547
    %v1549 = vmul.f32 %v1542, %v1548
    %v1550 = vsub.f32 %v1547, %v1426
    %v1551 = vmul.f32 %v1397, %v1550
    %v1552 = vadd.f32 %v1426, %v1551
    %v1553 = vsub.f32 %v1549, %v1429
    %v1554 = vmul.f32 %v1397, %v1553
    %v1555 = vadd.f32 %v1429, %v1554
    %1556 = vmatprep.subr.mxu0 %v733
    %1557 = vmatpush1.msra.mxu0 %v732
    %1558 = vmatprep.subr.mxu0 %v731
    %1559 = vmatpush1.msra.mxu0 %v730
    %1560 = vmatprep.subr.mxu0 %v729
    %1561 = vmatpush1.msra.mxu0 %v728
    %1562 = vmatprep.subr.mxu0 %v727
    %1563 = vmatpush1.msra.mxu0 %v726
    %1564 = vmatprep.subr.mxu0 %v725
    %1565 = vmatpush1.msra.mxu0 %v724
    %1566 = vmatprep.subr.mxu0 %v723
    %1567 = vmatpush1.msra.mxu0 %v722
    %1568 = vmatprep.subr.mxu0 %v721
    %1569 = vmatpush1.msra.mxu0 %v720
    %1570 = vmatprep.subr.mxu0 %v719
    %1571 = vmatpush1.msra.mxu0 %v718
    %1572 = vmatprep.subr.mxu0 %v717
    %1573 = vmatpush1.msra.mxu0 %v716
    %1574 = vmatprep.subr.mxu0 %v715
    %1575 = vmatpush1.msra.mxu0 %v714
    %1576 = vmatprep.subr.mxu0 %v713
    %1577 = vmatpush1.msra.mxu0 %v712
    %1578 = vmatprep.subr.mxu0 %v711
    %1579 = vmatpush1.msra.mxu0 %v710
    %1580 = vmatprep.subr.mxu0 %v709
    %1581 = vmatpush1.msra.mxu0 %v708
    %1582 = vmatprep.subr.mxu0 %v707
    %1583 = vmatpush1.msra.mxu0 %v706
    %1584 = vmatprep.subr.mxu0 %v705
    %1585 = vmatpush1.msra.mxu0 %v704
    %1586 = vmatprep.subr.mxu0 %v703
    %1587 = vmatpush1.msra.mxu0 %v702
    %1588 = vmatprep.subr.mxu0 %v765
    %1589 = vmatpush2.msra.mxu0 %v764
    %1590 = vmatprep.subr.mxu0 %v763
    %1591 = vmatpush2.msra.mxu0 %v762
    %1592 = vmatprep.subr.mxu0 %v761
    %1593 = vmatpush2.msra.mxu0 %v760
    %1594 = vmatprep.subr.mxu0 %v759
    %1595 = vmatpush2.msra.mxu0 %v758
    %1596 = vmatprep.subr.mxu0 %v757
    %1597 = vmatpush2.msra.mxu0 %v756
    %1598 = vmatprep.subr.mxu0 %v755
    %1599 = vmatpush2.msra.mxu0 %v754
    %1600 = vmatprep.subr.mxu0 %v753
    %1601 = vmatpush2.msra.mxu0 %v752
    %1602 = vmatprep.subr.mxu0 %v751
    %1603 = vmatpush2.msra.mxu0 %v750
    %1604 = vmatprep.subr.mxu0 %v749
    %1605 = vmatpush2.msra.mxu0 %v748
    %1606 = vmatprep.subr.mxu0 %v747
    %1607 = vmatpush2.msra.mxu0 %v746
    %1608 = vmatprep.subr.mxu0 %v745
    %1609 = vmatpush2.msra.mxu0 %v744
    %1610 = vmatprep.subr.mxu0 %v743
    %1611 = vmatpush2.msra.mxu0 %v742
    %1612 = vmatprep.subr.mxu0 %v741
    %1613 = vmatpush2.msra.mxu0 %v740
    %1614 = vmatprep.subr.mxu0 %v739
    %1615 = vmatpush2.msra.mxu0 %v738
    %1616 = vmatprep.subr.mxu0 %v737
    %1617 = vmatpush2.msra.mxu0 %v736
    %1618 = vmatprep.subr.mxu0 %v735
    %1619 = vmatpush2.msra.mxu0 %v734
    %1620 = vmatprep.mubr.f32.mxu0 %v1555
    %1621 = vmatmul.mubr.f32.gmra.mxu0 %v1529
    %v1622 = vpop.f32.mrf.mxu0
    %v1623 = vadd.f32 0.0, %v1622
    %v1624 = vpop.f32.mrf.mxu0
    %v1625 = vadd.f32 0.0, %v1624
    %1626 = vdwg.mxu0
    %v1627 = vld [vmem:[%s700] sm:$0xff]
    %v1628 = vadd.f32 %v1623, %v1627
    %v1629 = vtanh.pop %v1628
    %v1630 = vxor.u32 %v1628, 2147483648
    %v1631 = vmul.f32 %v1630, 1.442695
    %v1632 = vpow.pop %v1631
    %v1633 = vadd.f32 %v1632, 1.0
    %v1634 = vrcp.pop %v1633
    %v1635 = vmul.f32 1.0, %v1634
    %v1636 = vsel %vm768, %v1629, %v1635
    %1637 = vrot.lane.b32.xlu0 %v1636, 96
    %v1638 = vpop.permute.xlu0 %1637
    %1639 = vrot.lane.b32.xlu0 %v1636, 64
    %v1640 = vpop.permute.xlu0 %1639
    %1641 = vrot.lane.b32.xlu0 %v1636, 32
    %v1642 = vpop.permute.xlu0 %1641
    %v1643 = vmul.f32 %v1638, %v1526
    %v1644 = vmul.f32 %v1636, %v1642
    %v1645 = vadd.f32 %v1643, %v1644
    %v1646 = vtanh.pop %v1645
    %v1647 = vmul.f32 %v1640, %v1646
    %s1648 = scalar_lea.vmem [#allocation9], 56
    %v1649 = vld [vmem:[%s1648] sm:$0xff]
    %v1650 = vsub.f32 %v1647, %v1529
    %v1651 = vmul.f32 %v1649, %v1650
    %v1652 = vadd.f32 %v1529, %v1651
    %v1653 = vadd.f32 %v1625, %v775
    %v1654 = vtanh.pop %v1653
    %v1655 = vxor.u32 %v1653, 2147483648
    %v1656 = vmul.f32 %v1655, 1.442695
    %v1657 = vpow.pop %v1656
    %v1658 = vadd.f32 %v1657, 1.0
    %v1659 = vrcp.pop %v1658
    %v1660 = vmul.f32 1.0, %v1659
    %v1661 = vsel %vm768, %v1654, %v1660
    %1662 = vrot.lane.b32.xlu0 %v1661, 96
    %v1663 = vpop.permute.xlu0 %1662
    %1664 = vrot.lane.b32.xlu0 %v1661, 64
    %v1665 = vpop.permute.xlu0 %1664
    %1666 = vrot.lane.b32.xlu0 %v1661, 32
    %v1667 = vpop.permute.xlu0 %1666
    %v1668 = vmul.f32 %v1663, %v1552
    %v1669 = vmul.f32 %v1661, %v1667
    %v1670 = vadd.f32 %v1668, %v1669
    %v1671 = vtanh.pop %v1670
    %v1672 = vmul.f32 %v1665, %v1671
    %v1673 = vsub.f32 %v1670, %v1552
    %v1674 = vmul.f32 %v1523, %v1673
    %v1675 = vadd.f32 %v1552, %v1674
    %v1676 = vsub.f32 %v1672, %v1555
    %v1677 = vmul.f32 %v1523, %v1676
    %v1678 = vadd.f32 %v1555, %v1677
    %1679 = vmatprep.subr.mxu0 %v733
    %1680 = vmatpush1.msra.mxu0 %v732
    %1681 = vmatprep.subr.mxu0 %v731
    %1682 = vmatpush1.msra.mxu0 %v730
    %1683 = vmatprep.subr.mxu0 %v729
    %1684 = vmatpush1.msra.mxu0 %v728
    %1685 = vmatprep.subr.mxu0 %v727
    %1686 = vmatpush1.msra.mxu0 %v726
    %1687 = vmatprep.subr.mxu0 %v725
    %1688 = vmatpush1.msra.mxu0 %v724
    %1689 = vmatprep.subr.mxu0 %v723
    %1690 = vmatpush1.msra.mxu0 %v722
    %1691 = vmatprep.subr.mxu0 %v721
    %1692 = vmatpush1.msra.mxu0 %v720
    %1693 = vmatprep.subr.mxu0 %v719
    %1694 = vmatpush1.msra.mxu0 %v718
    %1695 = vmatprep.subr.mxu0 %v717
    %1696 = vmatpush1.msra.mxu0 %v716
    %1697 = vmatprep.subr.mxu0 %v715
    %1698 = vmatpush1.msra.mxu0 %v714
    %1699 = vmatprep.subr.mxu0 %v713
    %1700 = vmatpush1.msra.mxu0 %v712
    %1701 = vmatprep.subr.mxu0 %v711
    %1702 = vmatpush1.msra.mxu0 %v710
    %1703 = vmatprep.subr.mxu0 %v709
    %1704 = vmatpush1.msra.mxu0 %v708
    %1705 = vmatprep.subr.mxu0 %v707
    %1706 = vmatpush1.msra.mxu0 %v706
    %1707 = vmatprep.subr.mxu0 %v705
    %1708 = vmatpush1.msra.mxu0 %v704
    %1709 = vmatprep.subr.mxu0 %v703
    %1710 = vmatpush1.msra.mxu0 %v702
    %1711 = vmatprep.subr.mxu0 %v765
    %1712 = vmatpush2.msra.mxu0 %v764
    %1713 = vmatprep.subr.mxu0 %v763
    %1714 = vmatpush2.msra.mxu0 %v762
    %1715 = vmatprep.subr.mxu0 %v761
    %1716 = vmatpush2.msra.mxu0 %v760
    %1717 = vmatprep.subr.mxu0 %v759
    %1718 = vmatpush2.msra.mxu0 %v758
    %1719 = vmatprep.subr.mxu0 %v757
    %1720 = vmatpush2.msra.mxu0 %v756
    %1721 = vmatprep.subr.mxu0 %v755
    %1722 = vmatpush2.msra.mxu0 %v754
    %1723 = vmatprep.subr.mxu0 %v753
    %1724 = vmatpush2.msra.mxu0 %v752
    %1725 = vmatprep.subr.mxu0 %v751
    %1726 = vmatpush2.msra.mxu0 %v750
    %1727 = vmatprep.subr.mxu0 %v749
    %1728 = vmatpush2.msra.mxu0 %v748
    %1729 = vmatprep.subr.mxu0 %v747
    %1730 = vmatpush2.msra.mxu0 %v746
    %1731 = vmatprep.subr.mxu0 %v745
    %1732 = vmatpush2.msra.mxu0 %v744
    %1733 = vmatprep.subr.mxu0 %v743
    %1734 = vmatpush2.msra.mxu0 %v742
    %1735 = vmatprep.subr.mxu0 %v741
    %1736 = vmatpush2.msra.mxu0 %v740
    %1737 = vmatprep.subr.mxu0 %v739
    %1738 = vmatpush2.msra.mxu0 %v738
    %1739 = vmatprep.subr.mxu0 %v737
    %1740 = vmatpush2.msra.mxu0 %v736
    %1741 = vmatprep.subr.mxu0 %v735
    %1742 = vmatpush2.msra.mxu0 %v734
    %1743 = vmatprep.mubr.f32.mxu0 %v1678
    %1744 = vmatmul.mubr.f32.gmra.mxu0 %v1652
    %v1745 = vpop.f32.mrf.mxu0
    %v1746 = vpop.f32.mrf.mxu0
    %v1747 = vadd.f32 0.0, %v1746
    %1748 = vdwg.mxu0
    %v1749 = vadd.f32 %v1747, %v775
    %v1750 = vtanh.pop %v1749
    %v1751 = vxor.u32 %v1749, 2147483648
    %v1752 = vmul.f32 %v1751, 1.442695
    %v1753 = vpow.pop %v1752
    %v1754 = vadd.f32 %v1753, 1.0
    %v1755 = vrcp.pop %v1754
    %v1756 = vmul.f32 1.0, %v1755
    %v1757 = vsel %vm768, %v1750, %v1756
    %1758 = vrot.lane.b32.xlu0 %v1757, 96
    %v1759 = vpop.permute.xlu0 %1758
    %1760 = vrot.lane.b32.xlu0 %v1757, 64
    %v1761 = vpop.permute.xlu0 %1760
    %1762 = vrot.lane.b32.xlu0 %v1757, 32
    %v1763 = vpop.permute.xlu0 %1762
    %v1764 = vmul.f32 %v1759, %v1675
    %v1765 = vmul.f32 %v1757, %v1763
    %v1766 = vadd.f32 %v1764, %v1765
    %v1767 = vtanh.pop %v1766
    %v1768 = vmul.f32 %v1761, %v1767
    %v1769 = vsub.f32 %v1768, %v1678
    %v1770 = vmul.f32 %v1649, %v1769
    %v1771 = vadd.f32 %v1678, %v1770
    %1772 = vst [vmem:[#allocation11] sm:$0xff] %v1771
    // Predicated region
    $region38: #{tpu_custom_call.1} parent=1 // pred_check
      _
    $region39: #{tpu_custom_call.1} parent=1 // pred_check_branch
      %1774 = sbr.rel (0) target = $region41
    $region40: #{tpu_custom_call.1} parent=1 // pred_region
      %s1776 = ssub.s32 128, 128
      %1777 = vsyncadd [#allocation5], %s1776
      %s1779 = sshll.u32 [#allocation11], 4
      %s1780 = int_to_ptr.vmem [resolvable:$true] %s1779
      %1782 = dma.vmem_to_hbm [thread:$0]  %s1780, 128, %s5, [#allocation5]
    $region41: #{tpu_custom_call.1} parent=1 // pred_fallthru
      _
    // Predicated region
    $region42: #{tpu_custom_call.1} parent=1 // pred_check
      _
    $region43: #{tpu_custom_call.1} parent=1 // pred_check_branch
      %1784 = sbr.rel (0) target = $region45
    $region44: #{tpu_custom_call.1} parent=1 // pred_region
      %1785 = dma.done [#allocation5], 128
    $region45: #{tpu_custom_call.1} parent=1 // pred_fallthru
      _
    %1786 = vsyncpa [#allocation4], 1
    %1787 = vsyncpa [#allocation7], 1
    %1788 = vsyncpa [#allocation10], 1
    %1789 = vsyncpa [#allocation5], 1

</llo_original>
